<compile_context>
chip_gen: v6e
topology: v6e:2x2x1
jax: 0.10.0
libtpu: 0.0.40
codegen_flags: <defaults>
</compile_context>

<pallas_src>
import functools

import jax
import jax.numpy as jnp
from jax import lax
from jax.experimental import pallas as pl
from jax.experimental.pallas import tpu as pltpu


def _triplet_kernel(emb_ref, embt_ref, sqr_ref, sqc_ref, labr_ref, labc_ref,
                    out_ref, hp_ref, mx_ref, hn_ref,
                    *, margin, tm, tn, n_valid, b_pad):
    i = pl.program_id(0)            # row tile (anchors)  — "parallel"
    j = pl.program_id(1)            # column tile         — "arbitrary" (reduction)
    n_col = pl.num_programs(1)

    # (TM, D) @ (D, TN) on the MXU in the operand dtype, f32 accumulation.
    dot = jnp.dot(emb_ref[...], embt_ref[...], preferred_element_type=jnp.float32)

    # "Shifted" squared distance: d2_ij = max(sqr_i + s_ij, 0) with
    # s_ij = sqc_j - 2*dot_ij.  The row-constant sqr_i add, the clamp and the
    # sqrt all commute with the per-row max/min, so they are deferred to
    # _finalize — the tile does no EUP work and one fewer VPU add per element.
    s = sqc_ref[...] - 2.0 * dot

    # Thin index vectors; (TM,TN) masks come from broadcasted compares
    # (no materialized full-tile int32 iotas).
    row_ids = i * tm + lax.broadcasted_iota(jnp.int32, (tm, 1), 0)      # (TM,1)
    col_ids = j * tn + lax.broadcasted_iota(jnp.int32, (1, tn), 1)      # (1,TN)
    labels_eq = labr_ref[...] == labc_ref[...]                          # (TM,TN)
    not_diag = row_ids != col_ids                                       # (TM,TN)

    def tile_reductions(mask_padding):
        pos = jnp.logical_and(labels_eq, not_diag)
        neg = jnp.logical_not(labels_eq)
        if mask_padding:
            valid = col_ids < n_valid                                   # (1,TN)
            pos = jnp.logical_and(pos, valid)
            neg = jnp.logical_and(neg, valid)
            s_all = jnp.where(valid, s, -jnp.inf)
        else:
            s_all = s
        hp_t = jnp.max(jnp.where(pos, s, -jnp.inf), axis=1, keepdims=True)
        mx_t = jnp.max(s_all, axis=1, keepdims=True)
        hn_t = jnp.min(jnp.where(neg, s, jnp.inf), axis=1, keepdims=True)
        return hp_t, mx_t, hn_t

    def accumulate(hp_t, mx_t, hn_t):
        @pl.when(j == 0)                     # first column tile: write directly
        def _first():
            hp_ref[...] = hp_t
            mx_ref[...] = mx_t
            hn_ref[...] = hn_t

        @pl.when(j > 0)
        def _rest():
            hp_ref[...] = jnp.maximum(hp_ref[...], hp_t)
            mx_ref[...] = jnp.maximum(mx_ref[...], mx_t)
            hn_ref[...] = jnp.minimum(hn_ref[...], hn_t)

    if n_valid != b_pad:
        # Static: batch was padded.  The pad (< 128 <= TN) can only live in the
        # last column tile, so all masking work is gated to that single step.
        @pl.when(j == n_col - 1)
        def _masked():
            accumulate(*tile_reductions(True))

        @pl.when(j != n_col - 1)
        def _clean():
            accumulate(*tile_reductions(False))
    else:
        accumulate(*tile_reductions(False))

    @pl.when(j == n_col - 1)
    def _finalize():
        sqr = sqr_ref[...]
        # hardest positive: -inf sentinel (row w/o positives) -> clamp -> 0,
        # matching torch's max over dist*mask.
        hp2 = jnp.maximum(sqr + hp_ref[...], 0.0)
        # row max distance (over all valid columns).
        mx2 = jnp.maximum(sqr + mx_ref[...], 0.0)
        # hardest negative = min(min over diff-label d2, row-max d2); the +inf
        # sentinel (no negatives) falls back to the row max, exactly like
        # torch's min(d + row_max*same_label).
        hn2 = jnp.minimum(jnp.maximum(sqr + hn_ref[...], 0.0), mx2)
        loss = jnp.sqrt(hp2) - jnp.sqrt(hn2) + margin
        out_ref[...] = jnp.maximum(loss, 0.0)
        # TODO(synk): forward-only; reinstate the zero-mask sqrt guard iff a
        # custom VJP is ever added.


def _round_up(x, m):
    return (x + m - 1) // m * m


def _vmem_budget_bytes():
    # v7x has 64 MiB of VMEM per TensorCore (v5e/v6e: 128 MiB).  Derive the
    # budget from the runtime when possible; fall back to the smallest chip.
    cap = 64 * 1024 * 1024
    try:
        info_cap = int(getattr(pltpu.get_tpu_info(), "vmem_capacity_bytes", 0))
        if info_cap > 0:
            cap = info_cap
    except Exception:
        pass
    return min(int(cap * 3 // 4), 96 * 1024 * 1024)


def _vmem_estimate(tm, tn, d_pad, mm_itemsize):
    operands = 2 * (tm * d_pad + d_pad * tn) * mm_itemsize        # double-buffered MXU blocks
    interm = 6 * tm * tn * 4                                       # dot, s, masked selects
    small = (2 * 4 * tm * 128 * 4                                  # (tm,1) blocks + out (lane-padded)
             + 2 * 2 * 8 * tn * 4                                  # (1,tn) blocks (sublane-padded)
             + 3 * tm * 128 * 4)                                   # scratch accumulators
    return operands + interm + small


def _pick_tiles(b_pad, d_pad, mm_itemsize, budget):
    tm_cands = [256, 128] if (b_pad % 256 == 0 and b_pad >= 512) else [128]
    tn_cands = sorted(
        (t for t in range(128, min(b_pad, 2048) + 1, 128) if b_pad % t == 0),
        reverse=True)
    for tm in tm_cands:
        for tn in tn_cands:
            if _vmem_estimate(tm, tn, d_pad, mm_itemsize) <= budget:
                return tm, tn
    # TODO(synk): for very large D, tile the feature dim as an inner K loop.
    return 128, 128


def triplet_loss(embeddings, labels, margin=0.0, *, use_bf16_matmul=False,
                 block_sizes=None):
    """Batch-hard triplet loss. embeddings: (B, D) float, labels: (B,) int."""
    B, D = embeddings.shape
    d_pad = _round_up(max(D, 128), 128)           # lane-/MXU-depth aligned feature dim
    b_pad = _round_up(max(B, 128), 128)

    mm_dtype = jnp.bfloat16 if use_bf16_matmul else embeddings.dtype
    mm_itemsize = jnp.dtype(mm_dtype).itemsize

    budget = _vmem_budget_bytes()
    if block_sizes is not None:
        tm, tn = block_sizes
        if b_pad % tm or b_pad % tn:
            raise ValueError(f"block_sizes {block_sizes} must divide padded batch {b_pad}")
    else:
        tm, tn = _pick_tiles(b_pad, d_pad, mm_itemsize, budget)

    emb = jnp.pad(embeddings, ((0, b_pad - B), (0, d_pad - D)))
    ef = emb.astype(jnp.float32)
    sq = jnp.sum(ef * ef, axis=1)                 # squared norms once, O(B*D), kept f32
    sq_row = sq.reshape(b_pad, 1)
    sq_col = sq.reshape(1, b_pad)

    emb_mm = emb.astype(mm_dtype)                 # matmul operands (optionally bf16)
    emb_t = emb_mm.T                              # transpose hoisted out of the kernel

    lab = jnp.pad(labels.astype(jnp.int32), (0, b_pad - B))
    lab_row = lab.reshape(b_pad, 1)
    lab_col = lab.reshape(1, b_pad)

    n_row, n_col = b_pad // tm, b_pad // tn

    kernel = functools.partial(
        _triplet_kernel, margin=float(margin), tm=tm, tn=tn, n_valid=B, b_pad=b_pad)

    cost = pl.CostEstimate(
        flops=int(2 * b_pad * b_pad * d_pad + 8 * b_pad * b_pad),
        transcendentals=int(2 * b_pad),           # sqrt only at finalize
        bytes_accessed=int((n_row + 1) * b_pad * d_pad * mm_itemsize + 20 * b_pad),
    )

    grid_spec = pltpu.PrefetchScalarGridSpec(
        num_scalar_prefetch=0,
        grid=(n_row, n_col),
        in_specs=[
            pl.BlockSpec((tm, d_pad), lambda i, j: (i, 0)),   # anchor embeddings
            pl.BlockSpec((d_pad, tn), lambda i, j: (0, j)),   # column embeddings (pre-transposed)
            pl.BlockSpec((tm, 1), lambda i, j: (i, 0)),       # row squared norms
            pl.BlockSpec((1, tn), lambda i, j: (0, j)),       # column squared norms
            pl.BlockSpec((tm, 1), lambda i, j: (i, 0)),       # row labels
            pl.BlockSpec((1, tn), lambda i, j: (0, j)),       # column labels
        ],
        out_specs=pl.BlockSpec((tm, 1), lambda i, j: (i, 0)),
        scratch_shapes=[
            pltpu.VMEM((tm, 1), jnp.float32),   # running max of shifted-sq positive dist
            pltpu.VMEM((tm, 1), jnp.float32),   # running max of shifted-sq all dist
            pltpu.VMEM((tm, 1), jnp.float32),   # running min of shifted-sq negative dist
        ],
    )

    per_row = pl.pallas_call(
        kernel,
        out_shape=jax.ShapeDtypeStruct((b_pad, 1), jnp.float32),
        grid_spec=grid_spec,
        compiler_params=pltpu.CompilerParams(
            # "parallel" on the anchor axis lets row tiles shard across
            # TensorCores (megacore / v7x's 2 TCs); column axis is the reduction.
            dimension_semantics=("parallel", "arbitrary"),
            vmem_limit_bytes=budget,
        ),
        cost_estimate=cost,
    )(emb_mm, emb_t, sq_row, sq_col, lab_row, lab_col)

    # Tiny wrapper-side mean over the real (unpadded) anchors.
    return jnp.mean(per_row[:B, 0])


def _triplet_loss_ref(embeddings, labels, margin=0.0):
    """Pure-JAX reference mirroring the PyTorch module exactly."""
    e = embeddings.astype(jnp.float32)
    dot = e @ e.T
    sq = jnp.diag(dot)
    dist = jnp.maximum(sq[:, None] - 2.0 * dot + sq[None, :], 0.0)
    zmask = (dist == 0.0).astype(jnp.float32)
    dist = jnp.sqrt(dist + zmask * 1e-16) * (1.0 - zmask)

    B = labels.shape[0]
    eye = jnp.eye(B, dtype=bool)
    leq = labels[:, None] == labels[None, :]
    mask_ap = (~eye & leq).astype(jnp.float32)
    hp = jnp.max(dist * mask_ap, axis=1, keepdims=True)
    mask_an = (~leq).astype(jnp.float32)
    mx = jnp.max(dist, axis=1, keepdims=True)
    hn = jnp.min(dist + mx * (1.0 - mask_an), axis=1, keepdims=True)
    return jnp.mean(jnp.maximum(hp - hn + margin, 0.0))


if __name__ == "__main__":
    key = jax.random.PRNGKey(0)
    k1, k2, k3 = jax.random.split(key, 3)

    # A) tiny shape: exercises B/D padding and the single-tile masked path.
    B1, D1 = 8, 32
    emb1 = jax.random.normal(k1, (B1, D1), dtype=jnp.float32)
    lab1 = jnp.array([0, 0, 1, 1, 2, 2, 3, 3], dtype=jnp.int32)
    for m in (0.0, 0.5):
        out = jax.block_until_ready(triplet_loss(emb1, lab1, margin=m))
        ref = _triplet_loss_ref(emb1, lab1, margin=m)
        assert jnp.allclose(out, ref, atol=1e-4, rtol=1e-4), (m, out, ref)

    # B/C) multi-tile: B_pad=384.  Auto tiles (single column step) and forced
    # 128x128 tiles (3x3 grid: multi-step column reduction + gated
    # padded-column masking on the last column tile only).
    B2, D2 = 300, 96
    emb2 = jax.random.normal(k2, (B2, D2), dtype=jnp.float32)
    lab2 = jax.random.randint(k3, (B2,), 0, 7, dtype=jnp.int32)
    ref2 = _triplet_loss_ref(emb2, lab2, margin=0.2)
    out2a = jax.block_until_ready(triplet_loss(emb2, lab2, margin=0.2))
    assert jnp.allclose(out2a, ref2, atol=1e-4, rtol=1e-4), (out2a, ref2)
    out2b = jax.block_until_ready(
        triplet_loss(emb2, lab2, margin=0.2, block_sizes=(128, 128)))
    assert jnp.allclose(out2b, ref2, atol=1e-4, rtol=1e-4), (out2b, ref2)

    # D) exactly-aligned batch (no padding) with a multi-step column reduction.
    B3, D3 = 256, 128
    emb3 = jax.random.normal(k1, (B3, D3), dtype=jnp.float32)
    lab3 = jax.random.randint(k2, (B3,), 0, 5, dtype=jnp.int32)
    ref3 = _triplet_loss_ref(emb3, lab3, margin=0.1)
    out3 = jax.block_until_ready(
        triplet_loss(emb3, lab3, margin=0.1, block_sizes=(128, 128)))
    assert jnp.allclose(out3, ref3, atol=1e-4, rtol=1e-4), (out3, ref3)

    # E) bf16 MXU path (v6e/v7x fast path): f32 norms + f32 accumulation; loose
    # tolerance vs the f32 reference due to bf16 cancellation in sqr - 2*dot.
    out2c = jax.block_until_ready(
        triplet_loss(emb2, lab2, margin=0.2, use_bf16_matmul=True))
    assert jnp.isfinite(out2c)
    assert abs(float(out2c) - float(ref2)) < 0.05 * abs(float(ref2)) + 0.05, (out2c, ref2)

    print("KERNEL_OK")
</pallas_src>

<mosaic_0001>
module attributes {stable_mosaic.version = 11 : i64} {
  func.func @_triplet_kernel(%arg0: i32, %arg1: i32, %arg2: memref<128x128xf32, #tpu.memory_space<vmem>>, %arg3: memref<128x128xf32, #tpu.memory_space<vmem>>, %arg4: memref<128x1xf32, #tpu.memory_space<vmem>>, %arg5: memref<1x128xf32, #tpu.memory_space<vmem>>, %arg6: memref<128x1xi32, #tpu.memory_space<vmem>>, %arg7: memref<1x128xi32, #tpu.memory_space<vmem>>, %arg8: memref<128x1xf32, #tpu.memory_space<vmem>>, %arg9: memref<128x1xf32, #tpu.memory_space<vmem>>, %arg10: memref<128x1xf32, #tpu.memory_space<vmem>>, %arg11: memref<128x1xf32, #tpu.memory_space<vmem>>) attributes {dimension_semantics = [#tpu.dimension_semantics<parallel>, #tpu.dimension_semantics<arbitrary>], iteration_bounds = array<i64: 1, 1>, scalar_prefetch = 0 : i64, scratch_operands = 3 : i64, tpu.core_type = #tpu.core_type<tc>, window_params = [{transform_indices = @transform_0, window_bounds = array<i64: 128, 128>}, {transform_indices = @transform_1, window_bounds = array<i64: 128, 128>}, {transform_indices = @transform_2, window_bounds = array<i64: 128, 1>}, {transform_indices = @transform_3, window_bounds = array<i64: 1, 128>}, {transform_indices = @transform_4, window_bounds = array<i64: 128, 1>}, {transform_indices = @transform_5, window_bounds = array<i64: 1, 128>}, {transform_indices = @transform_6, window_bounds = array<i64: 128, 1>}]} {
    %c0 = arith.constant 0 : index
    %c0_0 = arith.constant 0 : index
    %0 = vector.load %arg2[%c0, %c0_0] : memref<128x128xf32, #tpu.memory_space<vmem>>, vector<128x128xf32>
    %c0_1 = arith.constant 0 : index
    %c0_2 = arith.constant 0 : index
    %1 = vector.load %arg3[%c0_1, %c0_2] : memref<128x128xf32, #tpu.memory_space<vmem>>, vector<128x128xf32>
    %cst = arith.constant dense<0.000000e+00> : vector<128x128xf32>
    %2 = tpu.matmul %0, %1, %cst {dimension_numbers = #tpu.dot_dimension_numbers<[1], [0], [0], [1], [0, 0, 1, 1], [], []>} : vector<128x128xf32>, vector<128x128xf32>, vector<128x128xf32> -> vector<128x128xf32>
    %c0_3 = arith.constant 0 : index
    %c0_4 = arith.constant 0 : index
    %3 = vector.load %arg5[%c0_3, %c0_4] : memref<1x128xf32, #tpu.memory_space<vmem>>, vector<1x128xf32>
    %cst_5 = arith.constant 2.000000e+00 : f32
    %4 = vector.broadcast %cst_5 : f32 to vector<128x128xf32>
    %5 = arith.mulf %4, %2 : vector<128x128xf32>
    %6 = vector.broadcast %3 : vector<1x128xf32> to vector<128x128xf32>
    %7 = arith.subf %6, %5 : vector<128x128xf32>
    %c128_i32 = arith.constant 128 : i32
    %8 = arith.muli %arg0, %c128_i32 : i32
    %9 = tpu.iota {dimensions = array<i32: 0>} : vector<128x1xi32>
    %10 = vector.broadcast %8 : i32 to vector<128x1xi32>
    %11 = arith.addi %10, %9 : vector<128x1xi32>
    %c128_i32_6 = arith.constant 128 : i32
    %12 = arith.muli %arg1, %c128_i32_6 : i32
    %13 = tpu.iota {dimensions = array<i32: 1>} : vector<1x128xi32>
    %14 = vector.broadcast %12 : i32 to vector<1x128xi32>
    %15 = arith.addi %14, %13 : vector<1x128xi32>
    %c0_7 = arith.constant 0 : index
    %c0_8 = arith.constant 0 : index
    %16 = vector.load %arg6[%c0_7, %c0_8] : memref<128x1xi32, #tpu.memory_space<vmem>>, vector<128x1xi32>
    %c0_9 = arith.constant 0 : index
    %c0_10 = arith.constant 0 : index
    %17 = vector.load %arg7[%c0_9, %c0_10] : memref<1x128xi32, #tpu.memory_space<vmem>>, vector<1x128xi32>
    %18 = vector.broadcast %16 : vector<128x1xi32> to vector<128x128xi32>
    %19 = vector.broadcast %17 : vector<1x128xi32> to vector<128x128xi32>
    %20 = arith.cmpi eq, %18, %19 : vector<128x128xi32>
    %21 = vector.broadcast %11 : vector<128x1xi32> to vector<128x128xi32>
    %22 = vector.broadcast %15 : vector<1x128xi32> to vector<128x128xi32>
    %23 = arith.cmpi ne, %21, %22 : vector<128x128xi32>
    %c0_i32 = arith.constant 0 : i32
    %24 = arith.cmpi eq, %arg1, %c0_i32 : i32
    %25 = arith.extui %24 : i1 to i32
    %c0_i32_11 = arith.constant 0 : i32
    %26 = arith.cmpi ne, %25, %c0_i32_11 : i32
    scf.if %26 {
      %33 = arith.andi %20, %23 : vector<128x128xi1>
      %cst_16 = arith.constant dense<true> : vector<128x128xi1>
      %34 = arith.xori %20, %cst_16 : vector<128x128xi1>
      %c8_i32 = arith.constant 8 : i32
      %35 = vector.broadcast %c8_i32 : i32 to vector<1x128xi32>
      %36 = arith.cmpi slt, %15, %35 : vector<1x128xi32>
      %37 = vector.broadcast %36 : vector<1x128xi1> to vector<128x128xi1>
      %38 = arith.andi %33, %37 : vector<128x128xi1>
      %39 = vector.broadcast %36 : vector<1x128xi1> to vector<128x128xi1>
      %40 = arith.andi %34, %39 : vector<128x128xi1>
      %cst_17 = arith.constant 0xFF800000 : f32
      %41 = vector.shape_cast %36 : vector<1x128xi1> to vector<1x128xi1>
      %42 = vector.broadcast %41 : vector<1x128xi1> to vector<128x128xi1>
      %43 = vector.broadcast %cst_17 : f32 to vector<128x128xf32>
      %44 = arith.select %42, %7, %43 : vector<128x128xi1>, vector<128x128xf32>
      %cst_18 = arith.constant 0xFF800000 : f32
      %45 = vector.broadcast %cst_18 : f32 to vector<128x128xf32>
      %46 = arith.select %38, %7, %45 : vector<128x128xi1>, vector<128x128xf32>
      %cst_19 = arith.constant dense<0xFF800000> : vector<128xf32>
      %47 = vector.multi_reduction <maximumf>, %46, %cst_19 [1] : vector<128x128xf32> to vector<128xf32>
      %48 = vector.shape_cast %47 : vector<128xf32> to vector<128x1xf32>
      %cst_20 = arith.constant dense<0xFF800000> : vector<128xf32>
      %49 = vector.multi_reduction <maximumf>, %44, %cst_20 [1] : vector<128x128xf32> to vector<128xf32>
      %50 = vector.shape_cast %49 : vector<128xf32> to vector<128x1xf32>
      %cst_21 = arith.constant 0x7F800000 : f32
      %51 = vector.broadcast %cst_21 : f32 to vector<128x128xf32>
      %52 = arith.select %40, %7, %51 : vector<128x128xi1>, vector<128x128xf32>
      %cst_22 = arith.constant dense<0x7F800000> : vector<128xf32>
      %53 = vector.multi_reduction <minimumf>, %52, %cst_22 [1] : vector<128x128xf32> to vector<128xf32>
      %54 = vector.shape_cast %53 : vector<128xf32> to vector<128x1xf32>
      %c0_i32_23 = arith.constant 0 : i32
      %55 = arith.cmpi eq, %arg1, %c0_i32_23 : i32
      %56 = arith.extui %55 : i1 to i32
      %c0_i32_24 = arith.constant 0 : i32
      %57 = arith.cmpi ne, %56, %c0_i32_24 : i32
      scf.if %57 {
        %c0_27 = arith.constant 0 : index
        %c0_28 = arith.constant 0 : index
        %61 = vector.load %arg9[%c0_27, %c0_28] : memref<128x1xf32, #tpu.memory_space<vmem>>, vector<128x1xf32>
        tpu.vector_store %arg9[%c0_27, %c0_28], %48 {strides = array<i32>} : memref<128x1xf32, #tpu.memory_space<vmem>>, vector<128x1xf32>,
        %c0_29 = arith.constant 0 : index
        %c0_30 = arith.constant 0 : index
        %62 = vector.load %arg10[%c0_29, %c0_30] : memref<128x1xf32, #tpu.memory_space<vmem>>, vector<128x1xf32>
        tpu.vector_store %arg10[%c0_29, %c0_30], %50 {strides = array<i32>} : memref<128x1xf32, #tpu.memory_space<vmem>>, vector<128x1xf32>,
        %c0_31 = arith.constant 0 : index
        %c0_32 = arith.constant 0 : index
        %63 = vector.load %arg11[%c0_31, %c0_32] : memref<128x1xf32, #tpu.memory_space<vmem>>, vector<128x1xf32>
        tpu.vector_store %arg11[%c0_31, %c0_32], %54 {strides = array<i32>} : memref<128x1xf32, #tpu.memory_space<vmem>>, vector<128x1xf32>,
      } else {
      }
      %c0_i32_25 = arith.constant 0 : i32
      %58 = arith.cmpi sgt, %arg1, %c0_i32_25 : i32
      %59 = arith.extui %58 : i1 to i32
      %c0_i32_26 = arith.constant 0 : i32
      %60 = arith.cmpi ne, %59, %c0_i32_26 : i32
      scf.if %60 {
        %c0_27 = arith.constant 0 : index
        %c0_28 = arith.constant 0 : index
        %61 = vector.load %arg9[%c0_27, %c0_28] : memref<128x1xf32, #tpu.memory_space<vmem>>, vector<128x1xf32>
        %62 = arith.maximumf %61, %48 : vector<128x1xf32>
        %c0_29 = arith.constant 0 : index
        %c0_30 = arith.constant 0 : index
        %63 = vector.load %arg9[%c0_29, %c0_30] : memref<128x1xf32, #tpu.memory_space<vmem>>, vector<128x1xf32>
        tpu.vector_store %arg9[%c0_29, %c0_30], %62 {strides = array<i32>} : memref<128x1xf32, #tpu.memory_space<vmem>>, vector<128x1xf32>,
        %c0_31 = arith.constant 0 : index
        %c0_32 = arith.constant 0 : index
        %64 = vector.load %arg10[%c0_31, %c0_32] : memref<128x1xf32, #tpu.memory_space<vmem>>, vector<128x1xf32>
        %65 = arith.maximumf %64, %50 : vector<128x1xf32>
        %c0_33 = arith.constant 0 : index
        %c0_34 = arith.constant 0 : index
        %66 = vector.load %arg10[%c0_33, %c0_34] : memref<128x1xf32, #tpu.memory_space<vmem>>, vector<128x1xf32>
        tpu.vector_store %arg10[%c0_33, %c0_34], %65 {strides = array<i32>} : memref<128x1xf32, #tpu.memory_space<vmem>>, vector<128x1xf32>,
        %c0_35 = arith.constant 0 : index
        %c0_36 = arith.constant 0 : index
        %67 = vector.load %arg11[%c0_35, %c0_36] : memref<128x1xf32, #tpu.memory_space<vmem>>, vector<128x1xf32>
        %68 = arith.minimumf %67, %54 : vector<128x1xf32>
        %c0_37 = arith.constant 0 : index
        %c0_38 = arith.constant 0 : index
        %69 = vector.load %arg11[%c0_37, %c0_38] : memref<128x1xf32, #tpu.memory_space<vmem>>, vector<128x1xf32>
        tpu.vector_store %arg11[%c0_37, %c0_38], %68 {strides = array<i32>} : memref<128x1xf32, #tpu.memory_space<vmem>>, vector<128x1xf32>,
      } else {
      }
    } else {
    }
    %c0_i32_12 = arith.constant 0 : i32
    %27 = arith.cmpi ne, %arg1, %c0_i32_12 : i32
    %28 = arith.extui %27 : i1 to i32
    %c0_i32_13 = arith.constant 0 : i32
    %29 = arith.cmpi ne, %28, %c0_i32_13 : i32
    scf.if %29 {
      %33 = arith.andi %20, %23 : vector<128x128xi1>
      %cst_16 = arith.constant dense<true> : vector<128x128xi1>
      %34 = arith.xori %20, %cst_16 : vector<128x128xi1>
      %cst_17 = arith.constant 0xFF800000 : f32
      %35 = vector.broadcast %cst_17 : f32 to vector<128x128xf32>
      %36 = arith.select %33, %7, %35 : vector<128x128xi1>, vector<128x128xf32>
      %cst_18 = arith.constant dense<0xFF800000> : vector<128xf32>
      %37 = vector.multi_reduction <maximumf>, %36, %cst_18 [1] : vector<128x128xf32> to vector<128xf32>
      %38 = vector.shape_cast %37 : vector<128xf32> to vector<128x1xf32>
      %cst_19 = arith.constant dense<0xFF800000> : vector<128xf32>
      %39 = vector.multi_reduction <maximumf>, %7, %cst_19 [1] : vector<128x128xf32> to vector<128xf32>
      %40 = vector.shape_cast %39 : vector<128xf32> to vector<128x1xf32>
      %cst_20 = arith.constant 0x7F800000 : f32
      %41 = vector.broadcast %cst_20 : f32 to vector<128x128xf32>
      %42 = arith.select %34, %7, %41 : vector<128x128xi1>, vector<128x128xf32>
      %cst_21 = arith.constant dense<0x7F800000> : vector<128xf32>
      %43 = vector.multi_reduction <minimumf>, %42, %cst_21 [1] : vector<128x128xf32> to vector<128xf32>
      %44 = vector.shape_cast %43 : vector<128xf32> to vector<128x1xf32>
      %c0_i32_22 = arith.constant 0 : i32
      %45 = arith.cmpi eq, %arg1, %c0_i32_22 : i32
      %46 = arith.extui %45 : i1 to i32
      %c0_i32_23 = arith.constant 0 : i32
      %47 = arith.cmpi ne, %46, %c0_i32_23 : i32
      scf.if %47 {
        %c0_26 = arith.constant 0 : index
        %c0_27 = arith.constant 0 : index
        %51 = vector.load %arg9[%c0_26, %c0_27] : memref<128x1xf32, #tpu.memory_space<vmem>>, vector<128x1xf32>
        tpu.vector_store %arg9[%c0_26, %c0_27], %38 {strides = array<i32>} : memref<128x1xf32, #tpu.memory_space<vmem>>, vector<128x1xf32>,
        %c0_28 = arith.constant 0 : index
        %c0_29 = arith.constant 0 : index
        %52 = vector.load %arg10[%c0_28, %c0_29] : memref<128x1xf32, #tpu.memory_space<vmem>>, vector<128x1xf32>
        tpu.vector_store %arg10[%c0_28, %c0_29], %40 {strides = array<i32>} : memref<128x1xf32, #tpu.memory_space<vmem>>, vector<128x1xf32>,
        %c0_30 = arith.constant 0 : index
        %c0_31 = arith.constant 0 : index
        %53 = vector.load %arg11[%c0_30, %c0_31] : memref<128x1xf32, #tpu.memory_space<vmem>>, vector<128x1xf32>
        tpu.vector_store %arg11[%c0_30, %c0_31], %44 {strides = array<i32>} : memref<128x1xf32, #tpu.memory_space<vmem>>, vector<128x1xf32>,
      } else {
      }
      %c0_i32_24 = arith.constant 0 : i32
      %48 = arith.cmpi sgt, %arg1, %c0_i32_24 : i32
      %49 = arith.extui %48 : i1 to i32
      %c0_i32_25 = arith.constant 0 : i32
      %50 = arith.cmpi ne, %49, %c0_i32_25 : i32
      scf.if %50 {
        %c0_26 = arith.constant 0 : index
        %c0_27 = arith.constant 0 : index
        %51 = vector.load %arg9[%c0_26, %c0_27] : memref<128x1xf32, #tpu.memory_space<vmem>>, vector<128x1xf32>
        %52 = arith.maximumf %51, %38 : vector<128x1xf32>
        %c0_28 = arith.constant 0 : index
        %c0_29 = arith.constant 0 : index
        %53 = vector.load %arg9[%c0_28, %c0_29] : memref<128x1xf32, #tpu.memory_space<vmem>>, vector<128x1xf32>
        tpu.vector_store %arg9[%c0_28, %c0_29], %52 {strides = array<i32>} : memref<128x1xf32, #tpu.memory_space<vmem>>, vector<128x1xf32>,
        %c0_30 = arith.constant 0 : index
        %c0_31 = arith.constant 0 : index
        %54 = vector.load %arg10[%c0_30, %c0_31] : memref<128x1xf32, #tpu.memory_space<vmem>>, vector<128x1xf32>
        %55 = arith.maximumf %54, %40 : vector<128x1xf32>
        %c0_32 = arith.constant 0 : index
        %c0_33 = arith.constant 0 : index
        %56 = vector.load %arg10[%c0_32, %c0_33] : memref<128x1xf32, #tpu.memory_space<vmem>>, vector<128x1xf32>
        tpu.vector_store %arg10[%c0_32, %c0_33], %55 {strides = array<i32>} : memref<128x1xf32, #tpu.memory_space<vmem>>, vector<128x1xf32>,
        %c0_34 = arith.constant 0 : index
        %c0_35 = arith.constant 0 : index
        %57 = vector.load %arg11[%c0_34, %c0_35] : memref<128x1xf32, #tpu.memory_space<vmem>>, vector<128x1xf32>
        %58 = arith.minimumf %57, %44 : vector<128x1xf32>
        %c0_36 = arith.constant 0 : index
        %c0_37 = arith.constant 0 : index
        %59 = vector.load %arg11[%c0_36, %c0_37] : memref<128x1xf32, #tpu.memory_space<vmem>>, vector<128x1xf32>
        tpu.vector_store %arg11[%c0_36, %c0_37], %58 {strides = array<i32>} : memref<128x1xf32, #tpu.memory_space<vmem>>, vector<128x1xf32>,
      } else {
      }
    } else {
    }
    %c0_i32_14 = arith.constant 0 : i32
    %30 = arith.cmpi eq, %arg1, %c0_i32_14 : i32
    %31 = arith.extui %30 : i1 to i32
    %c0_i32_15 = arith.constant 0 : i32
    %32 = arith.cmpi ne, %31, %c0_i32_15 : i32
    scf.if %32 {
      %c0_16 = arith.constant 0 : index
      %c0_17 = arith.constant 0 : index
      %33 = vector.load %arg4[%c0_16, %c0_17] : memref<128x1xf32, #tpu.memory_space<vmem>>, vector<128x1xf32>
      %c0_18 = arith.constant 0 : index
      %c0_19 = arith.constant 0 : index
      %34 = vector.load %arg9[%c0_18, %c0_19] : memref<128x1xf32, #tpu.memory_space<vmem>>, vector<128x1xf32>
      %35 = arith.addf %33, %34 : vector<128x1xf32>
      %cst_20 = arith.constant 0.000000e+00 : f32
      %36 = vector.broadcast %cst_20 : f32 to vector<128x1xf32>
      %37 = arith.maximumf %35, %36 : vector<128x1xf32>
      %c0_21 = arith.constant 0 : index
      %c0_22 = arith.constant 0 : index
      %38 = vector.load %arg10[%c0_21, %c0_22] : memref<128x1xf32, #tpu.memory_space<vmem>>, vector<128x1xf32>
      %39 = arith.addf %33, %38 : vector<128x1xf32>
      %cst_23 = arith.constant 0.000000e+00 : f32
      %40 = vector.broadcast %cst_23 : f32 to vector<128x1xf32>
      %41 = arith.maximumf %39, %40 : vector<128x1xf32>
      %c0_24 = arith.constant 0 : index
      %c0_25 = arith.constant 0 : index
      %42 = vector.load %arg11[%c0_24, %c0_25] : memref<128x1xf32, #tpu.memory_space<vmem>>, vector<128x1xf32>
      %43 = arith.addf %33, %42 : vector<128x1xf32>
      %cst_26 = arith.constant 0.000000e+00 : f32
      %44 = vector.broadcast %cst_26 : f32 to vector<128x1xf32>
      %45 = arith.maximumf %43, %44 : vector<128x1xf32>
      %46 = arith.minimumf %45, %41 : vector<128x1xf32>
      %47 = math.sqrt %37 : vector<128x1xf32>
      %48 = math.sqrt %46 : vector<128x1xf32>
      %49 = arith.subf %47, %48 : vector<128x1xf32>
      %cst_27 = arith.constant 0.000000e+00 : f32
      %50 = vector.broadcast %cst_27 : f32 to vector<128x1xf32>
      %51 = arith.addf %49, %50 : vector<128x1xf32>
      %cst_28 = arith.constant 0.000000e+00 : f32
      %52 = vector.broadcast %cst_28 : f32 to vector<128x1xf32>
      %53 = arith.maximumf %51, %52 : vector<128x1xf32>
      %c0_29 = arith.constant 0 : index
      %c0_30 = arith.constant 0 : index
      %54 = vector.load %arg8[%c0_29, %c0_30] : memref<128x1xf32, #tpu.memory_space<vmem>>, vector<128x1xf32>
      tpu.vector_store %arg8[%c0_29, %c0_30], %53 {strides = array<i32>} : memref<128x1xf32, #tpu.memory_space<vmem>>, vector<128x1xf32>,
    } else {
    }
    return
  }
  func.func @transform_0(%arg0: i32, %arg1: i32) -> (i32, i32) {
    %c0_i32 = arith.constant 0 : i32
    %c0_i32_0 = arith.constant 0 : i32
    return %arg0, %c0_i32 : i32, i32
  }
  func.func @transform_1(%arg0: i32, %arg1: i32) -> (i32, i32) {
    %c0_i32 = arith.constant 0 : i32
    %c0_i32_0 = arith.constant 0 : i32
    return %c0_i32, %arg1 : i32, i32
  }
  func.func @transform_2(%arg0: i32, %arg1: i32) -> (i32, i32) {
    %c0_i32 = arith.constant 0 : i32
    %c0_i32_0 = arith.constant 0 : i32
    return %arg0, %c0_i32 : i32, i32
  }
  func.func @transform_3(%arg0: i32, %arg1: i32) -> (i32, i32) {
    %c0_i32 = arith.constant 0 : i32
    %c0_i32_0 = arith.constant 0 : i32
    return %c0_i32, %arg1 : i32, i32
  }
  func.func @transform_4(%arg0: i32, %arg1: i32) -> (i32, i32) {
    %c0_i32 = arith.constant 0 : i32
    %c0_i32_0 = arith.constant 0 : i32
    return %arg0, %c0_i32 : i32, i32
  }
  func.func @transform_5(%arg0: i32, %arg1: i32) -> (i32, i32) {
    %c0_i32 = arith.constant 0 : i32
    %c0_i32_0 = arith.constant 0 : i32
    return %c0_i32, %arg1 : i32, i32
  }
  func.func @transform_6(%arg0: i32, %arg1: i32) -> (i32, i32) {
    %c0_i32 = arith.constant 0 : i32
    %c0_i32_0 = arith.constant 0 : i32
    return %arg0, %c0_i32 : i32, i32
  }
}

</mosaic_0001>

<llo_original>
// kernel: tpu_custom_call.1
$region0: #{tpu_custom_call.1}
  #allocation0 [shape = 'u32[]', space=smem, size = 0x4, offset = 0x4, fixed_abs, tag = 'smem constant byte address 0x4 - core index']
  #allocation1 [shape = 'u32[144,128]{1,0:T(1,128)}', space=vmem, size = 0x12000, scoped, tag = 'internal scratch']
  #allocation2 [shape = 'f32[128,1]{1,0:T(8,128)}', space=vmem, size = 0x10000, scoped, tag = 'scratch operand']
  #allocation3 [shape = 'f32[128,1]{1,0:T(8,128)}', space=vmem, size = 0x10000, scoped, tag = 'scratch operand']
  #allocation4 [shape = 'f32[128,1]{1,0:T(8,128)}', space=vmem, size = 0x10000, scoped, tag = 'scratch operand']
  %s0 = inlined_call_operand.vmem [shape: f32[128,128], index: 0, kind: input, shape index: {}]
  %s1 = inlined_call_operand.vmem [shape: f32[128,128], index: 1, kind: input, shape index: {}]
  %s2 = inlined_call_operand.vmem [shape: f32[128,1], index: 2, kind: input, shape index: {}]
  %s3 = inlined_call_operand.vmem [shape: f32[1,128], index: 3, kind: input, shape index: {}]
  %s4 = inlined_call_operand.vmem [shape: s32[128,1], index: 4, kind: input, shape index: {}]
  %s5 = inlined_call_operand.vmem [shape: s32[1,128], index: 5, kind: input, shape index: {}]
  %s6 = inlined_call_operand.vmem [shape: f32[128,1], index: 6, kind: output, shape index: {}]
  %s7 = sld [smem:[#allocation0]]
  $region58: #{tpu_custom_call.1} parent=0
    _
  %s9 = ssub.s32 1, %s7
  %s10 = scalar_select 0, %s9, %s7
  // Predicated region
  $region2: #{tpu_custom_call.1} parent=0 // pred_check
    _
  $region3: #{tpu_custom_call.1} parent=0 // pred_check_branch
    %12 = sbr.rel (0) target = $region5
  $region4: #{tpu_custom_call.1} parent=0 // pred_region
    _
  $region5: #{tpu_custom_call.1} parent=0 // pred_fallthru
    _
  // Predicated region
  $region6: #{tpu_custom_call.1} parent=0 // pred_check
    _
  $region7: #{tpu_custom_call.1} parent=0 // pred_check_branch
    %14 = sbr.rel (0) target = $region9
  $region8: #{tpu_custom_call.1} parent=0 // pred_region
    _
  $region9: #{tpu_custom_call.1} parent=0 // pred_fallthru
    _
  // Predicated region
  $region10: #{tpu_custom_call.1} parent=0 // pred_check
    _
  $region11: #{tpu_custom_call.1} parent=0 // pred_check_branch
    %16 = sbr.rel (0) target = $region13
  $region12: #{tpu_custom_call.1} parent=0 // pred_region
    _
  $region13: #{tpu_custom_call.1} parent=0 // pred_fallthru
    _
  // Predicated region
  $region14: #{tpu_custom_call.1} parent=0 // pred_check
    _
  $region15: #{tpu_custom_call.1} parent=0 // pred_check_branch
    %18 = sbr.rel (0) target = $region17
  $region16: #{tpu_custom_call.1} parent=0 // pred_region
    _
  $region17: #{tpu_custom_call.1} parent=0 // pred_fallthru
    _
  // Predicated region
  $region18: #{tpu_custom_call.1} parent=0 // pred_check
    _
  $region19: #{tpu_custom_call.1} parent=0 // pred_check_branch
    %20 = sbr.rel (0) target = $region21
  $region20: #{tpu_custom_call.1} parent=0 // pred_region
    _
  $region21: #{tpu_custom_call.1} parent=0 // pred_fallthru
    _
  // Predicated region
  $region22: #{tpu_custom_call.1} parent=0 // pred_check
    _
  $region23: #{tpu_custom_call.1} parent=0 // pred_check_branch
    %22 = sbr.rel (0) target = $region25
  $region24: #{tpu_custom_call.1} parent=0 // pred_region
    _
  $region25: #{tpu_custom_call.1} parent=0 // pred_fallthru
    _
  %v23 = vld [vmem:[%s0] sm:$0xff]
  %v24 = vld [vmem:[%s0 + $0x8] sm:$0xff]
  %v25 = vld [vmem:[%s0 + $0x10] sm:$0xff]
  %v26 = vld [vmem:[%s0 + $0x18] sm:$0xff]
  %v27 = vld [vmem:[%s0 + $0x20] sm:$0xff]
  %v28 = vld [vmem:[%s0 + $0x28] sm:$0xff]
  %v29 = vld [vmem:[%s0 + $0x30] sm:$0xff]
  %v30 = vld [vmem:[%s0 + $0x38] sm:$0xff]
  %v31 = vld [vmem:[%s0 + $0x40] sm:$0xff]
  %v32 = vld [vmem:[%s0 + $0x48] sm:$0xff]
  %v33 = vld [vmem:[%s0 + $0x50] sm:$0xff]
  %v34 = vld [vmem:[%s0 + $0x58] sm:$0xff]
  %v35 = vld [vmem:[%s0 + $0x60] sm:$0xff]
  %v36 = vld [vmem:[%s0 + $0x68] sm:$0xff]
  %v37 = vld [vmem:[%s0 + $0x70] sm:$0xff]
  %v38 = vld [vmem:[%s0 + $0x78] sm:$0xff]
  %v39 = vld [vmem:[%s1] sm:$0xff]
  %v40 = vld [vmem:[%s1 + $0x8] sm:$0xff]
  %v41 = vld [vmem:[%s1 + $0x10] sm:$0xff]
  %v42 = vld [vmem:[%s1 + $0x18] sm:$0xff]
  %v43 = vld [vmem:[%s1 + $0x20] sm:$0xff]
  %v44 = vld [vmem:[%s1 + $0x28] sm:$0xff]
  %v45 = vld [vmem:[%s1 + $0x30] sm:$0xff]
  %v46 = vld [vmem:[%s1 + $0x38] sm:$0xff]
  %v47 = vld [vmem:[%s1 + $0x40] sm:$0xff]
  %v48 = vld [vmem:[%s1 + $0x48] sm:$0xff]
  %v49 = vld [vmem:[%s1 + $0x50] sm:$0xff]
  %v50 = vld [vmem:[%s1 + $0x58] sm:$0xff]
  %v51 = vld [vmem:[%s1 + $0x60] sm:$0xff]
  %v52 = vld [vmem:[%s1 + $0x68] sm:$0xff]
  %v53 = vld [vmem:[%s1 + $0x70] sm:$0xff]
  %v54 = vld [vmem:[%s1 + $0x78] sm:$0xff]
  %55 = vmatprep.subr.mxu0 0.0
  %56 = vmatpush1.msra.mxu0 %v54
  %57 = vmatprep.subr.mxu0 0.0
  %58 = vmatpush1.msra.mxu0 %v53
  %59 = vmatprep.subr.mxu0 0.0
  %60 = vmatpush1.msra.mxu0 %v52
  %61 = vmatprep.subr.mxu0 0.0
  %62 = vmatpush1.msra.mxu0 %v51
  %63 = vmatprep.subr.mxu0 0.0
  %64 = vmatpush1.msra.mxu0 %v50
  %65 = vmatprep.subr.mxu0 0.0
  %66 = vmatpush1.msra.mxu0 %v49
  %67 = vmatprep.subr.mxu0 0.0
  %68 = vmatpush1.msra.mxu0 %v48
  %69 = vmatprep.subr.mxu0 0.0
  %70 = vmatpush1.msra.mxu0 %v47
  %71 = vmatprep.subr.mxu0 0.0
  %72 = vmatpush1.msra.mxu0 %v46
  %73 = vmatprep.subr.mxu0 0.0
  %74 = vmatpush1.msra.mxu0 %v45
  %75 = vmatprep.subr.mxu0 0.0
  %76 = vmatpush1.msra.mxu0 %v44
  %77 = vmatprep.subr.mxu0 0.0
  %78 = vmatpush1.msra.mxu0 %v43
  %79 = vmatprep.subr.mxu0 0.0
  %80 = vmatpush1.msra.mxu0 %v42
  %81 = vmatprep.subr.mxu0 0.0
  %82 = vmatpush1.msra.mxu0 %v41
  %83 = vmatprep.subr.mxu0 0.0
  %84 = vmatpush1.msra.mxu0 %v40
  %85 = vmatprep.subr.mxu0 0.0
  %86 = vmatpush1.msra.mxu0 %v39
  %87 = vmatprep.subr.mxu0 0.0
  %88 = vmatpush2.msra.mxu0 0.0
  %89 = vmatprep.subr.mxu0 0.0
  %90 = vmatpush2.msra.mxu0 0.0
  %91 = vmatprep.subr.mxu0 0.0
  %92 = vmatpush2.msra.mxu0 0.0
  %93 = vmatprep.subr.mxu0 0.0
  %94 = vmatpush2.msra.mxu0 0.0
  %95 = vmatprep.subr.mxu0 0.0
  %96 = vmatpush2.msra.mxu0 0.0
  %97 = vmatprep.subr.mxu0 0.0
  %98 = vmatpush2.msra.mxu0 0.0
  %99 = vmatprep.subr.mxu0 0.0
  %100 = vmatpush2.msra.mxu0 0.0
  %101 = vmatprep.subr.mxu0 0.0
  %102 = vmatpush2.msra.mxu0 0.0
  %103 = vmatprep.subr.mxu0 0.0
  %104 = vmatpush2.msra.mxu0 0.0
  %105 = vmatprep.subr.mxu0 0.0
  %106 = vmatpush2.msra.mxu0 0.0
  %107 = vmatprep.subr.mxu0 0.0
  %108 = vmatpush2.msra.mxu0 0.0
  %109 = vmatprep.subr.mxu0 0.0
  %110 = vmatpush2.msra.mxu0 0.0
  %111 = vmatprep.subr.mxu0 0.0
  %112 = vmatpush2.msra.mxu0 0.0
  %113 = vmatprep.subr.mxu0 0.0
  %114 = vmatpush2.msra.mxu0 0.0
  %115 = vmatprep.subr.mxu0 0.0
  %116 = vmatpush2.msra.mxu0 0.0
  %117 = vmatprep.subr.mxu0 0.0
  %118 = vmatpush2.msra.mxu0 0.0
  %119 = vmatprep.mubr.f32.mxu0 0.0
  %120 = vmatmul.mubr.f32.gmra.mxu0 %v23
  %v121 = vpop.f32.mrf.mxu0
  %v122 = vadd.f32 0.0, %v121
  %v123 = vpop.f32.mrf.mxu0
  %124 = vmatprep.mubr.f32.mxu0 0.0
  %125 = vmatmul.mubr.f32.gmra.mxu0 %v24
  %v126 = vpop.f32.mrf.mxu0
  %v127 = vadd.f32 0.0, %v126
  %v128 = vpop.f32.mrf.mxu0
  %129 = vmatprep.mubr.f32.mxu0 0.0
  %130 = vmatmul.mubr.f32.gmra.mxu0 %v25
  %v131 = vpop.f32.mrf.mxu0
  %v132 = vadd.f32 0.0, %v131
  %v133 = vpop.f32.mrf.mxu0
  %134 = vmatprep.mubr.f32.mxu0 0.0
  %135 = vmatmul.mubr.f32.gmra.mxu0 %v26
  %v136 = vpop.f32.mrf.mxu0
  %v137 = vadd.f32 0.0, %v136
  %v138 = vpop.f32.mrf.mxu0
  %139 = vmatprep.mubr.f32.mxu0 0.0
  %140 = vmatmul.mubr.f32.gmra.mxu0 %v27
  %v141 = vpop.f32.mrf.mxu0
  %v142 = vadd.f32 0.0, %v141
  %v143 = vpop.f32.mrf.mxu0
  %144 = vmatprep.mubr.f32.mxu0 0.0
  %145 = vmatmul.mubr.f32.gmra.mxu0 %v28
  %v146 = vpop.f32.mrf.mxu0
  %v147 = vadd.f32 0.0, %v146
  %v148 = vpop.f32.mrf.mxu0
  %149 = vmatprep.mubr.f32.mxu0 0.0
  %150 = vmatmul.mubr.f32.gmra.mxu0 %v29
  %v151 = vpop.f32.mrf.mxu0
  %v152 = vadd.f32 0.0, %v151
  %v153 = vpop.f32.mrf.mxu0
  %154 = vmatprep.mubr.f32.mxu0 0.0
  %155 = vmatmul.mubr.f32.gmra.mxu0 %v30
  %v156 = vpop.f32.mrf.mxu0
  %v157 = vadd.f32 0.0, %v156
  %v158 = vpop.f32.mrf.mxu0
  %159 = vmatprep.mubr.f32.mxu0 0.0
  %160 = vmatmul.mubr.f32.gmra.mxu0 %v31
  %v161 = vpop.f32.mrf.mxu0
  %v162 = vadd.f32 0.0, %v161
  %v163 = vpop.f32.mrf.mxu0
  %164 = vmatprep.mubr.f32.mxu0 0.0
  %165 = vmatmul.mubr.f32.gmra.mxu0 %v32
  %v166 = vpop.f32.mrf.mxu0
  %v167 = vadd.f32 0.0, %v166
  %v168 = vpop.f32.mrf.mxu0
  %169 = vmatprep.mubr.f32.mxu0 0.0
  %170 = vmatmul.mubr.f32.gmra.mxu0 %v33
  %v171 = vpop.f32.mrf.mxu0
  %v172 = vadd.f32 0.0, %v171
  %v173 = vpop.f32.mrf.mxu0
  %174 = vmatprep.mubr.f32.mxu0 0.0
  %175 = vmatmul.mubr.f32.gmra.mxu0 %v34
  %v176 = vpop.f32.mrf.mxu0
  %v177 = vadd.f32 0.0, %v176
  %v178 = vpop.f32.mrf.mxu0
  %179 = vmatprep.mubr.f32.mxu0 0.0
  %180 = vmatmul.mubr.f32.gmra.mxu0 %v35
  %v181 = vpop.f32.mrf.mxu0
  %v182 = vadd.f32 0.0, %v181
  %v183 = vpop.f32.mrf.mxu0
  %184 = vmatprep.mubr.f32.mxu0 0.0
  %185 = vmatmul.mubr.f32.gmra.mxu0 %v36
  %v186 = vpop.f32.mrf.mxu0
  %v187 = vadd.f32 0.0, %v186
  %v188 = vpop.f32.mrf.mxu0
  %189 = vmatprep.mubr.f32.mxu0 0.0
  %190 = vmatmul.mubr.f32.gmra.mxu0 %v37
  %v191 = vpop.f32.mrf.mxu0
  %v192 = vadd.f32 0.0, %v191
  %v193 = vpop.f32.mrf.mxu0
  %194 = vmatprep.mubr.f32.mxu0 0.0
  %195 = vmatmul.mubr.f32.gmra.mxu0 %v38
  %v196 = vpop.f32.mrf.mxu0
  %v197 = vadd.f32 0.0, %v196
  %v198 = vpop.f32.mrf.mxu0
  %199 = vdwg.mxu0
  %v200 = vld [vmem:[%s3] sm:$0x1]
  %v201 = vmul.f32 %v122, 2.0
  %v202 = vmul.f32 %v127, 2.0
  %v203 = vmul.f32 %v132, 2.0
  %v204 = vmul.f32 %v137, 2.0
  %v205 = vmul.f32 %v142, 2.0
  %v206 = vmul.f32 %v147, 2.0
  %v207 = vmul.f32 %v152, 2.0
  %v208 = vmul.f32 %v157, 2.0
  %v209 = vmul.f32 %v162, 2.0
  %v210 = vmul.f32 %v167, 2.0
  %v211 = vmul.f32 %v172, 2.0
  %v212 = vmul.f32 %v177, 2.0
  %v213 = vmul.f32 %v182, 2.0
  %v214 = vmul.f32 %v187, 2.0
  %v215 = vmul.f32 %v192, 2.0
  %v216 = vmul.f32 %v197, 2.0
  %v218 = vlaneseq
  %v219 = vshrl.u32 %v218, 7
  %v220 = vsub.s32 0, %v219
  %v221 = vrot.slane %v200, %v220
  %v223 = vsub.f32 %v221, %v201
  %v224 = vsub.f32 %v221, %v202
  %v225 = vsub.f32 %v221, %v203
  %v226 = vsub.f32 %v221, %v204
  %v227 = vsub.f32 %v221, %v205
  %v228 = vsub.f32 %v221, %v206
  %v229 = vsub.f32 %v221, %v207
  %v230 = vsub.f32 %v221, %v208
  %v231 = vsub.f32 %v221, %v209
  %v232 = vsub.f32 %v221, %v210
  %v233 = vsub.f32 %v221, %v211
  %v234 = vsub.f32 %v221, %v212
  %v235 = vsub.f32 %v221, %v213
  %v236 = vsub.f32 %v221, %v214
  %v237 = vsub.f32 %v221, %v215
  %v238 = vsub.f32 %v221, %v216
  %s239 = smul.u32 0, 128
  %v240 = vlaneseq
  %v241 = vshrl.u32 %v240, 7
  %v242 = vadd.s32 %v241, 8
  %v243 = vadd.s32 %v241, 16
  %v244 = vadd.s32 %v241, 24
  %v245 = vadd.s32 %v241, 32
  %v246 = vadd.s32 %v241, 40
  %v247 = vadd.s32 %v241, 48
  %v248 = vadd.s32 %v241, 56
  %v249 = vadd.s32 %v241, 64
  %v250 = vadd.s32 %v241, 72
  %v251 = vadd.s32 %v241, 80
  %v252 = vadd.s32 %v241, 88
  %v253 = vadd.s32 %v241, 96
  %v254 = vadd.s32 %v241, 104
  %v255 = vadd.s32 %v241, 112
  %v256 = vadd.s32 %v241, 120
  %v257 = vstv %s239
  %v258 = vadd.s32 %v257, %v241
  %v259 = vadd.s32 %v257, %v242
  %v260 = vadd.s32 %v257, %v243
  %v261 = vadd.s32 %v257, %v244
  %v262 = vadd.s32 %v257, %v245
  %v263 = vadd.s32 %v257, %v246
  %v264 = vadd.s32 %v257, %v247
  %v265 = vadd.s32 %v257, %v248
  %v266 = vadd.s32 %v257, %v249
  %v267 = vadd.s32 %v257, %v250
  %v268 = vadd.s32 %v257, %v251
  %v269 = vadd.s32 %v257, %v252
  %v270 = vadd.s32 %v257, %v253
  %v271 = vadd.s32 %v257, %v254
  %v272 = vadd.s32 %v257, %v255
  %v273 = vadd.s32 %v257, %v256
  %s274 = smul.u32 0, 128
  %v275 = vlaneseq
  %v276 = vand.u32 %v275, 127
  %v277 = vstv %s274
  %v278 = vadd.s32 %v277, %v276
  %v279 = vld [vmem:[%s4] sm:$0xff]
  %v280 = vld [vmem:[%s4 + $0x8] sm:$0xff]
  %v281 = vld [vmem:[%s4 + $0x10] sm:$0xff]
  %v282 = vld [vmem:[%s4 + $0x18] sm:$0xff]
  %v283 = vld [vmem:[%s4 + $0x20] sm:$0xff]
  %v284 = vld [vmem:[%s4 + $0x28] sm:$0xff]
  %v285 = vld [vmem:[%s4 + $0x30] sm:$0xff]
  %v286 = vld [vmem:[%s4 + $0x38] sm:$0xff]
  %v287 = vld [vmem:[%s4 + $0x40] sm:$0xff]
  %v288 = vld [vmem:[%s4 + $0x48] sm:$0xff]
  %v289 = vld [vmem:[%s4 + $0x50] sm:$0xff]
  %v290 = vld [vmem:[%s4 + $0x58] sm:$0xff]
  %v291 = vld [vmem:[%s4 + $0x60] sm:$0xff]
  %v292 = vld [vmem:[%s4 + $0x68] sm:$0xff]
  %v293 = vld [vmem:[%s4 + $0x70] sm:$0xff]
  %v294 = vld [vmem:[%s4 + $0x78] sm:$0xff]
  %v295 = vld [vmem:[%s5] sm:$0x1]
  %296 = vset.pattern.permute.xlu0 0
  %297 = vperm.xlu0 %296, %v279
  %v298 = vpop.permute.xlu0 %297
  %299 = vset.pattern.permute.xlu0 0
  %300 = vperm.xlu0 %299, %v280
  %v301 = vpop.permute.xlu0 %300
  %302 = vset.pattern.permute.xlu0 0
  %303 = vperm.xlu0 %302, %v281
  %v304 = vpop.permute.xlu0 %303
  %305 = vset.pattern.permute.xlu0 0
  %306 = vperm.xlu0 %305, %v282
  %v307 = vpop.permute.xlu0 %306
  %308 = vset.pattern.permute.xlu0 0
  %309 = vperm.xlu0 %308, %v283
  %v310 = vpop.permute.xlu0 %309
  %311 = vset.pattern.permute.xlu0 0
  %312 = vperm.xlu0 %311, %v284
  %v313 = vpop.permute.xlu0 %312
  %314 = vset.pattern.permute.xlu0 0
  %315 = vperm.xlu0 %314, %v285
  %v316 = vpop.permute.xlu0 %315
  %317 = vset.pattern.permute.xlu0 0
  %318 = vperm.xlu0 %317, %v286
  %v319 = vpop.permute.xlu0 %318
  %320 = vset.pattern.permute.xlu0 0
  %321 = vperm.xlu0 %320, %v287
  %v322 = vpop.permute.xlu0 %321
  %323 = vset.pattern.permute.xlu0 0
  %324 = vperm.xlu0 %323, %v288
  %v325 = vpop.permute.xlu0 %324
  %326 = vset.pattern.permute.xlu0 0
  %327 = vperm.xlu0 %326, %v289
  %v328 = vpop.permute.xlu0 %327
  %329 = vset.pattern.permute.xlu0 0
  %330 = vperm.xlu0 %329, %v290
  %v331 = vpop.permute.xlu0 %330
  %332 = vset.pattern.permute.xlu0 0
  %333 = vperm.xlu0 %332, %v291
  %v334 = vpop.permute.xlu0 %333
  %335 = vset.pattern.permute.xlu0 0
  %336 = vperm.xlu0 %335, %v292
  %v337 = vpop.permute.xlu0 %336
  %338 = vset.pattern.permute.xlu0 0
  %339 = vperm.xlu0 %338, %v293
  %v340 = vpop.permute.xlu0 %339
  %341 = vset.pattern.permute.xlu0 0
  %342 = vperm.xlu0 %341, %v294
  %v343 = vpop.permute.xlu0 %342
  %v344 = vlaneseq
  %v345 = vshrl.u32 %v344, 7
  %v346 = vsub.s32 0, %v345
  %v347 = vrot.slane %v295, %v346
  %vm348 = vcmp.eq.s32.totalorder %v298, %v347
  %vm349 = vcmp.eq.s32.totalorder %v301, %v347
  %vm350 = vcmp.eq.s32.totalorder %v304, %v347
  %vm351 = vcmp.eq.s32.totalorder %v307, %v347
  %vm352 = vcmp.eq.s32.totalorder %v310, %v347
  %vm353 = vcmp.eq.s32.totalorder %v313, %v347
  %vm354 = vcmp.eq.s32.totalorder %v316, %v347
  %vm355 = vcmp.eq.s32.totalorder %v319, %v347
  %vm356 = vcmp.eq.s32.totalorder %v322, %v347
  %vm357 = vcmp.eq.s32.totalorder %v325, %v347
  %vm358 = vcmp.eq.s32.totalorder %v328, %v347
  %vm359 = vcmp.eq.s32.totalorder %v331, %v347
  %vm360 = vcmp.eq.s32.totalorder %v334, %v347
  %vm361 = vcmp.eq.s32.totalorder %v337, %v347
  %vm362 = vcmp.eq.s32.totalorder %v340, %v347
  %vm363 = vcmp.eq.s32.totalorder %v343, %v347
  %vm364 = vcmp.ne.s32.totalorder %v258, %v278
  %vm365 = vcmp.ne.s32.totalorder %v259, %v278
  %vm366 = vcmp.ne.s32.totalorder %v260, %v278
  %vm367 = vcmp.ne.s32.totalorder %v261, %v278
  %vm368 = vcmp.ne.s32.totalorder %v262, %v278
  %vm369 = vcmp.ne.s32.totalorder %v263, %v278
  %vm370 = vcmp.ne.s32.totalorder %v264, %v278
  %vm371 = vcmp.ne.s32.totalorder %v265, %v278
  %vm372 = vcmp.ne.s32.totalorder %v266, %v278
  %vm373 = vcmp.ne.s32.totalorder %v267, %v278
  %vm374 = vcmp.ne.s32.totalorder %v268, %v278
  %vm375 = vcmp.ne.s32.totalorder %v269, %v278
  %vm376 = vcmp.ne.s32.totalorder %v270, %v278
  %vm377 = vcmp.ne.s32.totalorder %v271, %v278
  %vm378 = vcmp.ne.s32.totalorder %v272, %v278
  %vm379 = vcmp.ne.s32.totalorder %v273, %v278
  %p380 = scmp.eq.s32.totalorder 0, 0
  // Predicated region
  $region26: #{tpu_custom_call.1} parent=0 // pred_check
    %p381 = pneg %p380
  $region27: #{tpu_custom_call.1} parent=0 // pred_check_branch
    %383 = sbr.rel (%p381) target = $region29
  $region28: #{tpu_custom_call.1} parent=0 // pred_region
    %vm384 = vmand %vm348, %vm364
    %vm385 = vmand %vm349, %vm365
    %vm386 = vmand %vm350, %vm366
    %vm387 = vmand %vm351, %vm367
    %vm388 = vmand %vm352, %vm368
    %vm389 = vmand %vm353, %vm369
    %vm390 = vmand %vm354, %vm370
    %vm391 = vmand %vm355, %vm371
    %vm392 = vmand %vm356, %vm372
    %vm393 = vmand %vm357, %vm373
    %vm394 = vmand %vm358, %vm374
    %vm395 = vmand %vm359, %vm375
    %vm396 = vmand %vm360, %vm376
    %vm397 = vmand %vm361, %vm377
    %vm398 = vmand %vm362, %vm378
    %vm399 = vmand %vm363, %vm379
    %vm400 = vmxor %vm348, 1
    %vm401 = vmxor %vm349, 1
    %vm402 = vmxor %vm350, 1
    %vm403 = vmxor %vm351, 1
    %vm404 = vmxor %vm352, 1
    %vm405 = vmxor %vm353, 1
    %vm406 = vmxor %vm354, 1
    %vm407 = vmxor %vm355, 1
    %vm408 = vmxor %vm356, 1
    %vm409 = vmxor %vm357, 1
    %vm410 = vmxor %vm358, 1
    %vm411 = vmxor %vm359, 1
    %vm412 = vmxor %vm360, 1
    %vm413 = vmxor %vm361, 1
    %vm414 = vmxor %vm362, 1
    %vm415 = vmxor %vm363, 1
    %vm416 = vcmp.lt.s32.totalorder %v278, 8
    %v417 = vsel %vm416, 1, 0
    %vm418 = vcmp.eq.s32.totalorder %v417, 1
    %vm419 = vmand %vm384, %vm418
    %vm420 = vmand %vm385, %vm418
    %vm421 = vmand %vm386, %vm418
    %vm422 = vmand %vm387, %vm418
    %vm423 = vmand %vm388, %vm418
    %vm424 = vmand %vm389, %vm418
    %vm425 = vmand %vm390, %vm418
    %vm426 = vmand %vm391, %vm418
    %vm427 = vmand %vm392, %vm418
    %vm428 = vmand %vm393, %vm418
    %vm429 = vmand %vm394, %vm418
    %vm430 = vmand %vm395, %vm418
    %vm431 = vmand %vm396, %vm418
    %vm432 = vmand %vm397, %vm418
    %vm433 = vmand %vm398, %vm418
    %vm434 = vmand %vm399, %vm418
    %vm435 = vmand %vm400, %vm418
    %vm436 = vmand %vm401, %vm418
    %vm437 = vmand %vm402, %vm418
    %vm438 = vmand %vm403, %vm418
    %vm439 = vmand %vm404, %vm418
    %vm440 = vmand %vm405, %vm418
    %vm441 = vmand %vm406, %vm418
    %vm442 = vmand %vm407, %vm418
    %vm443 = vmand %vm408, %vm418
    %vm444 = vmand %vm409, %vm418
    %vm445 = vmand %vm410, %vm418
    %vm446 = vmand %vm411, %vm418
    %vm447 = vmand %vm412, %vm418
    %vm448 = vmand %vm413, %vm418
    %vm449 = vmand %vm414, %vm418
    %vm450 = vmand %vm415, %vm418
    %v451 = vsel %vm418, %v223, -inf
    %v452 = vsel %vm418, %v224, -inf
    %v453 = vsel %vm418, %v225, -inf
    %v454 = vsel %vm418, %v226, -inf
    %v455 = vsel %vm418, %v227, -inf
    %v456 = vsel %vm418, %v228, -inf
    %v457 = vsel %vm418, %v229, -inf
    %v458 = vsel %vm418, %v230, -inf
    %v459 = vsel %vm418, %v231, -inf
    %v460 = vsel %vm418, %v232, -inf
    %v461 = vsel %vm418, %v233, -inf
    %v462 = vsel %vm418, %v234, -inf
    %v463 = vsel %vm418, %v235, -inf
    %v464 = vsel %vm418, %v236, -inf
    %v465 = vsel %vm418, %v237, -inf
    %v466 = vsel %vm418, %v238, -inf
    %v467 = vsel %vm419, %v223, -inf
    %v468 = vsel %vm420, %v224, -inf
    %v469 = vsel %vm421, %v225, -inf
    %v470 = vsel %vm422, %v226, -inf
    %v471 = vsel %vm423, %v227, -inf
    %v472 = vsel %vm424, %v228, -inf
    %v473 = vsel %vm425, %v229, -inf
    %v474 = vsel %vm426, %v230, -inf
    %v475 = vsel %vm427, %v231, -inf
    %v476 = vsel %vm428, %v232, -inf
    %v477 = vsel %vm429, %v233, -inf
    %v478 = vsel %vm430, %v234, -inf
    %v479 = vsel %vm431, %v235, -inf
    %v480 = vsel %vm432, %v236, -inf
    %v481 = vsel %vm433, %v237, -inf
    %v482 = vsel %vm434, %v238, -inf
    %483 = vmax.xlane.f32.xlu0 %v467
    %v484 = vpop.xlane.xlu0 %483
    %485 = vmax.xlane.f32.xlu0 %v468
    %v486 = vpop.xlane.xlu0 %485
    %487 = vmax.xlane.f32.xlu0 %v469
    %v488 = vpop.xlane.xlu0 %487
    %489 = vmax.xlane.f32.xlu0 %v470
    %v490 = vpop.xlane.xlu0 %489
    %491 = vmax.xlane.f32.xlu0 %v471
    %v492 = vpop.xlane.xlu0 %491
    %493 = vmax.xlane.f32.xlu0 %v472
    %v494 = vpop.xlane.xlu0 %493
    %495 = vmax.xlane.f32.xlu0 %v473
    %v496 = vpop.xlane.xlu0 %495
    %497 = vmax.xlane.f32.xlu0 %v474
    %v498 = vpop.xlane.xlu0 %497
    %499 = vmax.xlane.f32.xlu0 %v475
    %v500 = vpop.xlane.xlu0 %499
    %501 = vmax.xlane.f32.xlu0 %v476
    %v502 = vpop.xlane.xlu0 %501
    %503 = vmax.xlane.f32.xlu0 %v477
    %v504 = vpop.xlane.xlu0 %503
    %505 = vmax.xlane.f32.xlu0 %v478
    %v506 = vpop.xlane.xlu0 %505
    %507 = vmax.xlane.f32.xlu0 %v479
    %v508 = vpop.xlane.xlu0 %507
    %509 = vmax.xlane.f32.xlu0 %v480
    %v510 = vpop.xlane.xlu0 %509
    %511 = vmax.xlane.f32.xlu0 %v481
    %v512 = vpop.xlane.xlu0 %511
    %513 = vmax.xlane.f32.xlu0 %v482
    %v514 = vpop.xlane.xlu0 %513
    %515 = vmax.xlane.f32.xlu0 %v451
    %v516 = vpop.xlane.xlu0 %515
    %517 = vmax.xlane.f32.xlu0 %v452
    %v518 = vpop.xlane.xlu0 %517
    %519 = vmax.xlane.f32.xlu0 %v453
    %v520 = vpop.xlane.xlu0 %519
    %521 = vmax.xlane.f32.xlu0 %v454
    %v522 = vpop.xlane.xlu0 %521
    %523 = vmax.xlane.f32.xlu0 %v455
    %v524 = vpop.xlane.xlu0 %523
    %525 = vmax.xlane.f32.xlu0 %v456
    %v526 = vpop.xlane.xlu0 %525
    %527 = vmax.xlane.f32.xlu0 %v457
    %v528 = vpop.xlane.xlu0 %527
    %529 = vmax.xlane.f32.xlu0 %v458
    %v530 = vpop.xlane.xlu0 %529
    %531 = vmax.xlane.f32.xlu0 %v459
    %v532 = vpop.xlane.xlu0 %531
    %533 = vmax.xlane.f32.xlu0 %v460
    %v534 = vpop.xlane.xlu0 %533
    %535 = vmax.xlane.f32.xlu0 %v461
    %v536 = vpop.xlane.xlu0 %535
    %537 = vmax.xlane.f32.xlu0 %v462
    %v538 = vpop.xlane.xlu0 %537
    %539 = vmax.xlane.f32.xlu0 %v463
    %v540 = vpop.xlane.xlu0 %539
    %541 = vmax.xlane.f32.xlu0 %v464
    %v542 = vpop.xlane.xlu0 %541
    %543 = vmax.xlane.f32.xlu0 %v465
    %v544 = vpop.xlane.xlu0 %543
    %545 = vmax.xlane.f32.xlu0 %v466
    %v546 = vpop.xlane.xlu0 %545
    %v547 = vsel %vm435, %v223, inf
    %v548 = vsel %vm436, %v224, inf
    %v549 = vsel %vm437, %v225, inf
    %v550 = vsel %vm438, %v226, inf
    %v551 = vsel %vm439, %v227, inf
    %v552 = vsel %vm440, %v228, inf
    %v553 = vsel %vm441, %v229, inf
    %v554 = vsel %vm442, %v230, inf
    %v555 = vsel %vm443, %v231, inf
    %v556 = vsel %vm444, %v232, inf
    %v557 = vsel %vm445, %v233, inf
    %v558 = vsel %vm446, %v234, inf
    %v559 = vsel %vm447, %v235, inf
    %v560 = vsel %vm448, %v236, inf
    %v561 = vsel %vm449, %v237, inf
    %v562 = vsel %vm450, %v238, inf
    %563 = vmin.xlane.f32.xlu0 %v547
    %v564 = vpop.xlane.xlu0 %563
    %565 = vmin.xlane.f32.xlu0 %v548
    %v566 = vpop.xlane.xlu0 %565
    %567 = vmin.xlane.f32.xlu0 %v549
    %v568 = vpop.xlane.xlu0 %567
    %569 = vmin.xlane.f32.xlu0 %v550
    %v570 = vpop.xlane.xlu0 %569
    %571 = vmin.xlane.f32.xlu0 %v551
    %v572 = vpop.xlane.xlu0 %571
    %573 = vmin.xlane.f32.xlu0 %v552
    %v574 = vpop.xlane.xlu0 %573
    %575 = vmin.xlane.f32.xlu0 %v553
    %v576 = vpop.xlane.xlu0 %575
    %577 = vmin.xlane.f32.xlu0 %v554
    %v578 = vpop.xlane.xlu0 %577
    %579 = vmin.xlane.f32.xlu0 %v555
    %v580 = vpop.xlane.xlu0 %579
    %581 = vmin.xlane.f32.xlu0 %v556
    %v582 = vpop.xlane.xlu0 %581
    %583 = vmin.xlane.f32.xlu0 %v557
    %v584 = vpop.xlane.xlu0 %583
    %585 = vmin.xlane.f32.xlu0 %v558
    %v586 = vpop.xlane.xlu0 %585
    %587 = vmin.xlane.f32.xlu0 %v559
    %v588 = vpop.xlane.xlu0 %587
    %589 = vmin.xlane.f32.xlu0 %v560
    %v590 = vpop.xlane.xlu0 %589
    %591 = vmin.xlane.f32.xlu0 %v561
    %v592 = vpop.xlane.xlu0 %591
    %593 = vmin.xlane.f32.xlu0 %v562
    %v594 = vpop.xlane.xlu0 %593
    %vm595 = vcmask 7168
    %596 = vst.msk [vmem:[#allocation2] sm:$0xff] %vm595, %v484
    %597 = vst.msk [vmem:[#allocation2 + $0x8] sm:$0xff] %vm595, %v486
    %598 = vst.msk [vmem:[#allocation2 + $0x10] sm:$0xff] %vm595, %v488
    %599 = vst.msk [vmem:[#allocation2 + $0x18] sm:$0xff] %vm595, %v490
    %600 = vst.msk [vmem:[#allocation2 + $0x20] sm:$0xff] %vm595, %v492
    %601 = vst.msk [vmem:[#allocation2 + $0x28] sm:$0xff] %vm595, %v494
    %602 = vst.msk [vmem:[#allocation2 + $0x30] sm:$0xff] %vm595, %v496
    %603 = vst.msk [vmem:[#allocation2 + $0x38] sm:$0xff] %vm595, %v498
    %604 = vst.msk [vmem:[#allocation2 + $0x40] sm:$0xff] %vm595, %v500
    %605 = vst.msk [vmem:[#allocation2 + $0x48] sm:$0xff] %vm595, %v502
    %606 = vst.msk [vmem:[#allocation2 + $0x50] sm:$0xff] %vm595, %v504
    %607 = vst.msk [vmem:[#allocation2 + $0x58] sm:$0xff] %vm595, %v506
    %608 = vst.msk [vmem:[#allocation2 + $0x60] sm:$0xff] %vm595, %v508
    %609 = vst.msk [vmem:[#allocation2 + $0x68] sm:$0xff] %vm595, %v510
    %610 = vst.msk [vmem:[#allocation2 + $0x70] sm:$0xff] %vm595, %v512
    %611 = vst.msk [vmem:[#allocation2 + $0x78] sm:$0xff] %vm595, %v514
    %612 = vst.msk [vmem:[#allocation3] sm:$0xff] %vm595, %v516
    %613 = vst.msk [vmem:[#allocation3 + $0x8] sm:$0xff] %vm595, %v518
    %614 = vst.msk [vmem:[#allocation3 + $0x10] sm:$0xff] %vm595, %v520
    %615 = vst.msk [vmem:[#allocation3 + $0x18] sm:$0xff] %vm595, %v522
    %616 = vst.msk [vmem:[#allocation3 + $0x20] sm:$0xff] %vm595, %v524
    %617 = vst.msk [vmem:[#allocation3 + $0x28] sm:$0xff] %vm595, %v526
    %618 = vst.msk [vmem:[#allocation3 + $0x30] sm:$0xff] %vm595, %v528
    %619 = vst.msk [vmem:[#allocation3 + $0x38] sm:$0xff] %vm595, %v530
    %620 = vst.msk [vmem:[#allocation3 + $0x40] sm:$0xff] %vm595, %v532
    %621 = vst.msk [vmem:[#allocation3 + $0x48] sm:$0xff] %vm595, %v534
    %622 = vst.msk [vmem:[#allocation3 + $0x50] sm:$0xff] %vm595, %v536
    %623 = vst.msk [vmem:[#allocation3 + $0x58] sm:$0xff] %vm595, %v538
    %624 = vst.msk [vmem:[#allocation3 + $0x60] sm:$0xff] %vm595, %v540
    %625 = vst.msk [vmem:[#allocation3 + $0x68] sm:$0xff] %vm595, %v542
    %626 = vst.msk [vmem:[#allocation3 + $0x70] sm:$0xff] %vm595, %v544
    %627 = vst.msk [vmem:[#allocation3 + $0x78] sm:$0xff] %vm595, %v546
    %628 = vst.msk [vmem:[#allocation4] sm:$0xff] %vm595, %v564
    %629 = vst.msk [vmem:[#allocation4 + $0x8] sm:$0xff] %vm595, %v566
    %630 = vst.msk [vmem:[#allocation4 + $0x10] sm:$0xff] %vm595, %v568
    %631 = vst.msk [vmem:[#allocation4 + $0x18] sm:$0xff] %vm595, %v570
    %632 = vst.msk [vmem:[#allocation4 + $0x20] sm:$0xff] %vm595, %v572
    %633 = vst.msk [vmem:[#allocation4 + $0x28] sm:$0xff] %vm595, %v574
    %634 = vst.msk [vmem:[#allocation4 + $0x30] sm:$0xff] %vm595, %v576
    %635 = vst.msk [vmem:[#allocation4 + $0x38] sm:$0xff] %vm595, %v578
    %636 = vst.msk [vmem:[#allocation4 + $0x40] sm:$0xff] %vm595, %v580
    %637 = vst.msk [vmem:[#allocation4 + $0x48] sm:$0xff] %vm595, %v582
    %638 = vst.msk [vmem:[#allocation4 + $0x50] sm:$0xff] %vm595, %v584
    %639 = vst.msk [vmem:[#allocation4 + $0x58] sm:$0xff] %vm595, %v586
    %640 = vst.msk [vmem:[#allocation4 + $0x60] sm:$0xff] %vm595, %v588
    %641 = vst.msk [vmem:[#allocation4 + $0x68] sm:$0xff] %vm595, %v590
    %642 = vst.msk [vmem:[#allocation4 + $0x70] sm:$0xff] %vm595, %v592
    %643 = vst.msk [vmem:[#allocation4 + $0x78] sm:$0xff] %vm595, %v594
    %p644 = scmp.gt.s32.totalorder 0, 0
    // Predicated region
    $region30: #{tpu_custom_call.1} parent=28 // pred_check
      %p645 = pneg %p644
    $region31: #{tpu_custom_call.1} parent=28 // pred_check_branch
      %647 = sbr.rel (%p645) target = $region33
    $region32: #{tpu_custom_call.1} parent=28 // pred_region
      %v648 = vld [vmem:[#allocation2] sm:$0xff]
      %v649 = vld [vmem:[#allocation2 + $0x8] sm:$0xff]
      %v650 = vld [vmem:[#allocation2 + $0x10] sm:$0xff]
      %v651 = vld [vmem:[#allocation2 + $0x18] sm:$0xff]
      %v652 = vld [vmem:[#allocation2 + $0x20] sm:$0xff]
      %v653 = vld [vmem:[#allocation2 + $0x28] sm:$0xff]
      %v654 = vld [vmem:[#allocation2 + $0x30] sm:$0xff]
      %v655 = vld [vmem:[#allocation2 + $0x38] sm:$0xff]
      %v656 = vld [vmem:[#allocation2 + $0x40] sm:$0xff]
      %v657 = vld [vmem:[#allocation2 + $0x48] sm:$0xff]
      %v658 = vld [vmem:[#allocation2 + $0x50] sm:$0xff]
      %v659 = vld [vmem:[#allocation2 + $0x58] sm:$0xff]
      %v660 = vld [vmem:[#allocation2 + $0x60] sm:$0xff]
      %v661 = vld [vmem:[#allocation2 + $0x68] sm:$0xff]
      %v662 = vld [vmem:[#allocation2 + $0x70] sm:$0xff]
      %v663 = vld [vmem:[#allocation2 + $0x78] sm:$0xff]
      %v664 = vmax.f32 %v648, %v484
      %v665 = vmax.f32 %v649, %v486
      %v666 = vmax.f32 %v650, %v488
      %v667 = vmax.f32 %v651, %v490
      %v668 = vmax.f32 %v652, %v492
      %v669 = vmax.f32 %v653, %v494
      %v670 = vmax.f32 %v654, %v496
      %v671 = vmax.f32 %v655, %v498
      %v672 = vmax.f32 %v656, %v500
      %v673 = vmax.f32 %v657, %v502
      %v674 = vmax.f32 %v658, %v504
      %v675 = vmax.f32 %v659, %v506
      %v676 = vmax.f32 %v660, %v508
      %v677 = vmax.f32 %v661, %v510
      %v678 = vmax.f32 %v662, %v512
      %v679 = vmax.f32 %v663, %v514
      %680 = vst.msk [vmem:[#allocation2] sm:$0xff] %vm595, %v664
      %681 = vst.msk [vmem:[#allocation2 + $0x8] sm:$0xff] %vm595, %v665
      %682 = vst.msk [vmem:[#allocation2 + $0x10] sm:$0xff] %vm595, %v666
      %683 = vst.msk [vmem:[#allocation2 + $0x18] sm:$0xff] %vm595, %v667
      %684 = vst.msk [vmem:[#allocation2 + $0x20] sm:$0xff] %vm595, %v668
      %685 = vst.msk [vmem:[#allocation2 + $0x28] sm:$0xff] %vm595, %v669
      %686 = vst.msk [vmem:[#allocation2 + $0x30] sm:$0xff] %vm595, %v670
      %687 = vst.msk [vmem:[#allocation2 + $0x38] sm:$0xff] %vm595, %v671
      %688 = vst.msk [vmem:[#allocation2 + $0x40] sm:$0xff] %vm595, %v672
      %689 = vst.msk [vmem:[#allocation2 + $0x48] sm:$0xff] %vm595, %v673
      %690 = vst.msk [vmem:[#allocation2 + $0x50] sm:$0xff] %vm595, %v674
      %691 = vst.msk [vmem:[#allocation2 + $0x58] sm:$0xff] %vm595, %v675
      %692 = vst.msk [vmem:[#allocation2 + $0x60] sm:$0xff] %vm595, %v676
      %693 = vst.msk [vmem:[#allocation2 + $0x68] sm:$0xff] %vm595, %v677
      %694 = vst.msk [vmem:[#allocation2 + $0x70] sm:$0xff] %vm595, %v678
      %695 = vst.msk [vmem:[#allocation2 + $0x78] sm:$0xff] %vm595, %v679
      %v696 = vld [vmem:[#allocation3] sm:$0xff]
      %v697 = vld [vmem:[#allocation3 + $0x8] sm:$0xff]
      %v698 = vld [vmem:[#allocation3 + $0x10] sm:$0xff]
      %v699 = vld [vmem:[#allocation3 + $0x18] sm:$0xff]
      %v700 = vld [vmem:[#allocation3 + $0x20] sm:$0xff]
      %v701 = vld [vmem:[#allocation3 + $0x28] sm:$0xff]
      %v702 = vld [vmem:[#allocation3 + $0x30] sm:$0xff]
      %v703 = vld [vmem:[#allocation3 + $0x38] sm:$0xff]
      %v704 = vld [vmem:[#allocation3 + $0x40] sm:$0xff]
      %v705 = vld [vmem:[#allocation3 + $0x48] sm:$0xff]
      %v706 = vld [vmem:[#allocation3 + $0x50] sm:$0xff]
      %v707 = vld [vmem:[#allocation3 + $0x58] sm:$0xff]
      %v708 = vld [vmem:[#allocation3 + $0x60] sm:$0xff]
      %v709 = vld [vmem:[#allocation3 + $0x68] sm:$0xff]
      %v710 = vld [vmem:[#allocation3 + $0x70] sm:$0xff]
      %v711 = vld [vmem:[#allocation3 + $0x78] sm:$0xff]
      %v712 = vmax.f32 %v696, %v516
      %v713 = vmax.f32 %v697, %v518
      %v714 = vmax.f32 %v698, %v520
      %v715 = vmax.f32 %v699, %v522
      %v716 = vmax.f32 %v700, %v524
      %v717 = vmax.f32 %v701, %v526
      %v718 = vmax.f32 %v702, %v528
      %v719 = vmax.f32 %v703, %v530
      %v720 = vmax.f32 %v704, %v532
      %v721 = vmax.f32 %v705, %v534
      %v722 = vmax.f32 %v706, %v536
      %v723 = vmax.f32 %v707, %v538
      %v724 = vmax.f32 %v708, %v540
      %v725 = vmax.f32 %v709, %v542
      %v726 = vmax.f32 %v710, %v544
      %v727 = vmax.f32 %v711, %v546
      %728 = vst.msk [vmem:[#allocation3] sm:$0xff] %vm595, %v712
      %729 = vst.msk [vmem:[#allocation3 + $0x8] sm:$0xff] %vm595, %v713
      %730 = vst.msk [vmem:[#allocation3 + $0x10] sm:$0xff] %vm595, %v714
      %731 = vst.msk [vmem:[#allocation3 + $0x18] sm:$0xff] %vm595, %v715
      %732 = vst.msk [vmem:[#allocation3 + $0x20] sm:$0xff] %vm595, %v716
      %733 = vst.msk [vmem:[#allocation3 + $0x28] sm:$0xff] %vm595, %v717
      %734 = vst.msk [vmem:[#allocation3 + $0x30] sm:$0xff] %vm595, %v718
      %735 = vst.msk [vmem:[#allocation3 + $0x38] sm:$0xff] %vm595, %v719
      %736 = vst.msk [vmem:[#allocation3 + $0x40] sm:$0xff] %vm595, %v720
      %737 = vst.msk [vmem:[#allocation3 + $0x48] sm:$0xff] %vm595, %v721
      %738 = vst.msk [vmem:[#allocation3 + $0x50] sm:$0xff] %vm595, %v722
      %739 = vst.msk [vmem:[#allocation3 + $0x58] sm:$0xff] %vm595, %v723
      %740 = vst.msk [vmem:[#allocation3 + $0x60] sm:$0xff] %vm595, %v724
      %741 = vst.msk [vmem:[#allocation3 + $0x68] sm:$0xff] %vm595, %v725
      %742 = vst.msk [vmem:[#allocation3 + $0x70] sm:$0xff] %vm595, %v726
      %743 = vst.msk [vmem:[#allocation3 + $0x78] sm:$0xff] %vm595, %v727
      %v744 = vld [vmem:[#allocation4] sm:$0xff]
      %v745 = vld [vmem:[#allocation4 + $0x8] sm:$0xff]
      %v746 = vld [vmem:[#allocation4 + $0x10] sm:$0xff]
      %v747 = vld [vmem:[#allocation4 + $0x18] sm:$0xff]
      %v748 = vld [vmem:[#allocation4 + $0x20] sm:$0xff]
      %v749 = vld [vmem:[#allocation4 + $0x28] sm:$0xff]
      %v750 = vld [vmem:[#allocation4 + $0x30] sm:$0xff]
      %v751 = vld [vmem:[#allocation4 + $0x38] sm:$0xff]
      %v752 = vld [vmem:[#allocation4 + $0x40] sm:$0xff]
      %v753 = vld [vmem:[#allocation4 + $0x48] sm:$0xff]
      %v754 = vld [vmem:[#allocation4 + $0x50] sm:$0xff]
      %v755 = vld [vmem:[#allocation4 + $0x58] sm:$0xff]
      %v756 = vld [vmem:[#allocation4 + $0x60] sm:$0xff]
      %v757 = vld [vmem:[#allocation4 + $0x68] sm:$0xff]
      %v758 = vld [vmem:[#allocation4 + $0x70] sm:$0xff]
      %v759 = vld [vmem:[#allocation4 + $0x78] sm:$0xff]
      %v760 = vmin.f32 %v744, %v564
      %v761 = vmin.f32 %v745, %v566
      %v762 = vmin.f32 %v746, %v568
      %v763 = vmin.f32 %v747, %v570
      %v764 = vmin.f32 %v748, %v572
      %v765 = vmin.f32 %v749, %v574
      %v766 = vmin.f32 %v750, %v576
      %v767 = vmin.f32 %v751, %v578
      %v768 = vmin.f32 %v752, %v580
      %v769 = vmin.f32 %v753, %v582
      %v770 = vmin.f32 %v754, %v584
      %v771 = vmin.f32 %v755, %v586
      %v772 = vmin.f32 %v756, %v588
      %v773 = vmin.f32 %v757, %v590
      %v774 = vmin.f32 %v758, %v592
      %v775 = vmin.f32 %v759, %v594
      %776 = vst.msk [vmem:[#allocation4] sm:$0xff] %vm595, %v760
      %777 = vst.msk [vmem:[#allocation4 + $0x8] sm:$0xff] %vm595, %v761
      %778 = vst.msk [vmem:[#allocation4 + $0x10] sm:$0xff] %vm595, %v762
      %779 = vst.msk [vmem:[#allocation4 + $0x18] sm:$0xff] %vm595, %v763
      %780 = vst.msk [vmem:[#allocation4 + $0x20] sm:$0xff] %vm595, %v764
      %781 = vst.msk [vmem:[#allocation4 + $0x28] sm:$0xff] %vm595, %v765
      %782 = vst.msk [vmem:[#allocation4 + $0x30] sm:$0xff] %vm595, %v766
      %783 = vst.msk [vmem:[#allocation4 + $0x38] sm:$0xff] %vm595, %v767
      %784 = vst.msk [vmem:[#allocation4 + $0x40] sm:$0xff] %vm595, %v768
      %785 = vst.msk [vmem:[#allocation4 + $0x48] sm:$0xff] %vm595, %v769
      %786 = vst.msk [vmem:[#allocation4 + $0x50] sm:$0xff] %vm595, %v770
      %787 = vst.msk [vmem:[#allocation4 + $0x58] sm:$0xff] %vm595, %v771
      %788 = vst.msk [vmem:[#allocation4 + $0x60] sm:$0xff] %vm595, %v772
      %789 = vst.msk [vmem:[#allocation4 + $0x68] sm:$0xff] %vm595, %v773
      %790 = vst.msk [vmem:[#allocation4 + $0x70] sm:$0xff] %vm595, %v774
      %791 = vst.msk [vmem:[#allocation4 + $0x78] sm:$0xff] %vm595, %v775
    $region33: #{tpu_custom_call.1} parent=28 // pred_fallthru
      _
  $region29: #{tpu_custom_call.1} parent=0 // pred_fallthru
    _
  %p792 = scmp.ne.s32.totalorder 0, 0
  // Predicated region
  $region34: #{tpu_custom_call.1} parent=0 // pred_check
    %p793 = pneg %p792
  $region35: #{tpu_custom_call.1} parent=0 // pred_check_branch
    %795 = sbr.rel (%p793) target = $region37
  $region36: #{tpu_custom_call.1} parent=0 // pred_region
    %vm796 = vmand %vm348, %vm364
    %vm797 = vmand %vm349, %vm365
    %vm798 = vmand %vm350, %vm366
    %vm799 = vmand %vm351, %vm367
    %vm800 = vmand %vm352, %vm368
    %vm801 = vmand %vm353, %vm369
    %vm802 = vmand %vm354, %vm370
    %vm803 = vmand %vm355, %vm371
    %vm804 = vmand %vm356, %vm372
    %vm805 = vmand %vm357, %vm373
    %vm806 = vmand %vm358, %vm374
    %vm807 = vmand %vm359, %vm375
    %vm808 = vmand %vm360, %vm376
    %vm809 = vmand %vm361, %vm377
    %vm810 = vmand %vm362, %vm378
    %vm811 = vmand %vm363, %vm379
    %vm812 = vmxor %vm348, 1
    %vm813 = vmxor %vm349, 1
    %vm814 = vmxor %vm350, 1
    %vm815 = vmxor %vm351, 1
    %vm816 = vmxor %vm352, 1
    %vm817 = vmxor %vm353, 1
    %vm818 = vmxor %vm354, 1
    %vm819 = vmxor %vm355, 1
    %vm820 = vmxor %vm356, 1
    %vm821 = vmxor %vm357, 1
    %vm822 = vmxor %vm358, 1
    %vm823 = vmxor %vm359, 1
    %vm824 = vmxor %vm360, 1
    %vm825 = vmxor %vm361, 1
    %vm826 = vmxor %vm362, 1
    %vm827 = vmxor %vm363, 1
    %v828 = vsel %vm796, %v223, -inf
    %v829 = vsel %vm797, %v224, -inf
    %v830 = vsel %vm798, %v225, -inf
    %v831 = vsel %vm799, %v226, -inf
    %v832 = vsel %vm800, %v227, -inf
    %v833 = vsel %vm801, %v228, -inf
    %v834 = vsel %vm802, %v229, -inf
    %v835 = vsel %vm803, %v230, -inf
    %v836 = vsel %vm804, %v231, -inf
    %v837 = vsel %vm805, %v232, -inf
    %v838 = vsel %vm806, %v233, -inf
    %v839 = vsel %vm807, %v234, -inf
    %v840 = vsel %vm808, %v235, -inf
    %v841 = vsel %vm809, %v236, -inf
    %v842 = vsel %vm810, %v237, -inf
    %v843 = vsel %vm811, %v238, -inf
    %844 = vmax.xlane.f32.xlu0 %v828
    %v845 = vpop.xlane.xlu0 %844
    %846 = vmax.xlane.f32.xlu0 %v829
    %v847 = vpop.xlane.xlu0 %846
    %848 = vmax.xlane.f32.xlu0 %v830
    %v849 = vpop.xlane.xlu0 %848
    %850 = vmax.xlane.f32.xlu0 %v831
    %v851 = vpop.xlane.xlu0 %850
    %852 = vmax.xlane.f32.xlu0 %v832
    %v853 = vpop.xlane.xlu0 %852
    %854 = vmax.xlane.f32.xlu0 %v833
    %v855 = vpop.xlane.xlu0 %854
    %856 = vmax.xlane.f32.xlu0 %v834
    %v857 = vpop.xlane.xlu0 %856
    %858 = vmax.xlane.f32.xlu0 %v835
    %v859 = vpop.xlane.xlu0 %858
    %860 = vmax.xlane.f32.xlu0 %v836
    %v861 = vpop.xlane.xlu0 %860
    %862 = vmax.xlane.f32.xlu0 %v837
    %v863 = vpop.xlane.xlu0 %862
    %864 = vmax.xlane.f32.xlu0 %v838
    %v865 = vpop.xlane.xlu0 %864
    %866 = vmax.xlane.f32.xlu0 %v839
    %v867 = vpop.xlane.xlu0 %866
    %868 = vmax.xlane.f32.xlu0 %v840
    %v869 = vpop.xlane.xlu0 %868
    %870 = vmax.xlane.f32.xlu0 %v841
    %v871 = vpop.xlane.xlu0 %870
    %872 = vmax.xlane.f32.xlu0 %v842
    %v873 = vpop.xlane.xlu0 %872
    %874 = vmax.xlane.f32.xlu0 %v843
    %v875 = vpop.xlane.xlu0 %874
    %876 = vmax.xlane.f32.xlu0 %v223
    %v877 = vpop.xlane.xlu0 %876
    %878 = vmax.xlane.f32.xlu0 %v224
    %v879 = vpop.xlane.xlu0 %878
    %880 = vmax.xlane.f32.xlu0 %v225
    %v881 = vpop.xlane.xlu0 %880
    %882 = vmax.xlane.f32.xlu0 %v226
    %v883 = vpop.xlane.xlu0 %882
    %884 = vmax.xlane.f32.xlu0 %v227
    %v885 = vpop.xlane.xlu0 %884
    %886 = vmax.xlane.f32.xlu0 %v228
    %v887 = vpop.xlane.xlu0 %886
    %888 = vmax.xlane.f32.xlu0 %v229
    %v889 = vpop.xlane.xlu0 %888
    %890 = vmax.xlane.f32.xlu0 %v230
    %v891 = vpop.xlane.xlu0 %890
    %892 = vmax.xlane.f32.xlu0 %v231
    %v893 = vpop.xlane.xlu0 %892
    %894 = vmax.xlane.f32.xlu0 %v232
    %v895 = vpop.xlane.xlu0 %894
    %896 = vmax.xlane.f32.xlu0 %v233
    %v897 = vpop.xlane.xlu0 %896
    %898 = vmax.xlane.f32.xlu0 %v234
    %v899 = vpop.xlane.xlu0 %898
    %900 = vmax.xlane.f32.xlu0 %v235
    %v901 = vpop.xlane.xlu0 %900
    %902 = vmax.xlane.f32.xlu0 %v236
    %v903 = vpop.xlane.xlu0 %902
    %904 = vmax.xlane.f32.xlu0 %v237
    %v905 = vpop.xlane.xlu0 %904
    %906 = vmax.xlane.f32.xlu0 %v238
    %v907 = vpop.xlane.xlu0 %906
    %v908 = vsel %vm812, %v223, inf
    %v909 = vsel %vm813, %v224, inf
    %v910 = vsel %vm814, %v225, inf
    %v911 = vsel %vm815, %v226, inf
    %v912 = vsel %vm816, %v227, inf
    %v913 = vsel %vm817, %v228, inf
    %v914 = vsel %vm818, %v229, inf
    %v915 = vsel %vm819, %v230, inf
    %v916 = vsel %vm820, %v231, inf
    %v917 = vsel %vm821, %v232, inf
    %v918 = vsel %vm822, %v233, inf
    %v919 = vsel %vm823, %v234, inf
    %v920 = vsel %vm824, %v235, inf
    %v921 = vsel %vm825, %v236, inf
    %v922 = vsel %vm826, %v237, inf
    %v923 = vsel %vm827, %v238, inf
    %924 = vmin.xlane.f32.xlu0 %v908
    %v925 = vpop.xlane.xlu0 %924
    %926 = vmin.xlane.f32.xlu0 %v909
    %v927 = vpop.xlane.xlu0 %926
    %928 = vmin.xlane.f32.xlu0 %v910
    %v929 = vpop.xlane.xlu0 %928
    %930 = vmin.xlane.f32.xlu0 %v911
    %v931 = vpop.xlane.xlu0 %930
    %932 = vmin.xlane.f32.xlu0 %v912
    %v933 = vpop.xlane.xlu0 %932
    %934 = vmin.xlane.f32.xlu0 %v913
    %v935 = vpop.xlane.xlu0 %934
    %936 = vmin.xlane.f32.xlu0 %v914
    %v937 = vpop.xlane.xlu0 %936
    %938 = vmin.xlane.f32.xlu0 %v915
    %v939 = vpop.xlane.xlu0 %938
    %940 = vmin.xlane.f32.xlu0 %v916
    %v941 = vpop.xlane.xlu0 %940
    %942 = vmin.xlane.f32.xlu0 %v917
    %v943 = vpop.xlane.xlu0 %942
    %944 = vmin.xlane.f32.xlu0 %v918
    %v945 = vpop.xlane.xlu0 %944
    %946 = vmin.xlane.f32.xlu0 %v919
    %v947 = vpop.xlane.xlu0 %946
    %948 = vmin.xlane.f32.xlu0 %v920
    %v949 = vpop.xlane.xlu0 %948
    %950 = vmin.xlane.f32.xlu0 %v921
    %v951 = vpop.xlane.xlu0 %950
    %952 = vmin.xlane.f32.xlu0 %v922
    %v953 = vpop.xlane.xlu0 %952
    %954 = vmin.xlane.f32.xlu0 %v923
    %v955 = vpop.xlane.xlu0 %954
    // Predicated region
    $region38: #{tpu_custom_call.1} parent=36 // pred_check
      %p956 = pneg %p380
    $region39: #{tpu_custom_call.1} parent=36 // pred_check_branch
      %958 = sbr.rel (%p956) target = $region41
    $region40: #{tpu_custom_call.1} parent=36 // pred_region
      %vm959 = vcmask 7168
      %960 = vst.msk [vmem:[#allocation2] sm:$0xff] %vm959, %v845
      %961 = vst.msk [vmem:[#allocation2 + $0x8] sm:$0xff] %vm959, %v847
      %962 = vst.msk [vmem:[#allocation2 + $0x10] sm:$0xff] %vm959, %v849
      %963 = vst.msk [vmem:[#allocation2 + $0x18] sm:$0xff] %vm959, %v851
      %964 = vst.msk [vmem:[#allocation2 + $0x20] sm:$0xff] %vm959, %v853
      %965 = vst.msk [vmem:[#allocation2 + $0x28] sm:$0xff] %vm959, %v855
      %966 = vst.msk [vmem:[#allocation2 + $0x30] sm:$0xff] %vm959, %v857
      %967 = vst.msk [vmem:[#allocation2 + $0x38] sm:$0xff] %vm959, %v859
      %968 = vst.msk [vmem:[#allocation2 + $0x40] sm:$0xff] %vm959, %v861
      %969 = vst.msk [vmem:[#allocation2 + $0x48] sm:$0xff] %vm959, %v863
      %970 = vst.msk [vmem:[#allocation2 + $0x50] sm:$0xff] %vm959, %v865
      %971 = vst.msk [vmem:[#allocation2 + $0x58] sm:$0xff] %vm959, %v867
      %972 = vst.msk [vmem:[#allocation2 + $0x60] sm:$0xff] %vm959, %v869
      %973 = vst.msk [vmem:[#allocation2 + $0x68] sm:$0xff] %vm959, %v871
      %974 = vst.msk [vmem:[#allocation2 + $0x70] sm:$0xff] %vm959, %v873
      %975 = vst.msk [vmem:[#allocation2 + $0x78] sm:$0xff] %vm959, %v875
      %976 = vst.msk [vmem:[#allocation3] sm:$0xff] %vm959, %v877
      %977 = vst.msk [vmem:[#allocation3 + $0x8] sm:$0xff] %vm959, %v879
      %978 = vst.msk [vmem:[#allocation3 + $0x10] sm:$0xff] %vm959, %v881
      %979 = vst.msk [vmem:[#allocation3 + $0x18] sm:$0xff] %vm959, %v883
      %980 = vst.msk [vmem:[#allocation3 + $0x20] sm:$0xff] %vm959, %v885
      %981 = vst.msk [vmem:[#allocation3 + $0x28] sm:$0xff] %vm959, %v887
      %982 = vst.msk [vmem:[#allocation3 + $0x30] sm:$0xff] %vm959, %v889
      %983 = vst.msk [vmem:[#allocation3 + $0x38] sm:$0xff] %vm959, %v891
      %984 = vst.msk [vmem:[#allocation3 + $0x40] sm:$0xff] %vm959, %v893
      %985 = vst.msk [vmem:[#allocation3 + $0x48] sm:$0xff] %vm959, %v895
      %986 = vst.msk [vmem:[#allocation3 + $0x50] sm:$0xff] %vm959, %v897
      %987 = vst.msk [vmem:[#allocation3 + $0x58] sm:$0xff] %vm959, %v899
      %988 = vst.msk [vmem:[#allocation3 + $0x60] sm:$0xff] %vm959, %v901
      %989 = vst.msk [vmem:[#allocation3 + $0x68] sm:$0xff] %vm959, %v903
      %990 = vst.msk [vmem:[#allocation3 + $0x70] sm:$0xff] %vm959, %v905
      %991 = vst.msk [vmem:[#allocation3 + $0x78] sm:$0xff] %vm959, %v907
      %992 = vst.msk [vmem:[#allocation4] sm:$0xff] %vm959, %v925
      %993 = vst.msk [vmem:[#allocation4 + $0x8] sm:$0xff] %vm959, %v927
      %994 = vst.msk [vmem:[#allocation4 + $0x10] sm:$0xff] %vm959, %v929
      %995 = vst.msk [vmem:[#allocation4 + $0x18] sm:$0xff] %vm959, %v931
      %996 = vst.msk [vmem:[#allocation4 + $0x20] sm:$0xff] %vm959, %v933
      %997 = vst.msk [vmem:[#allocation4 + $0x28] sm:$0xff] %vm959, %v935
      %998 = vst.msk [vmem:[#allocation4 + $0x30] sm:$0xff] %vm959, %v937
      %999 = vst.msk [vmem:[#allocation4 + $0x38] sm:$0xff] %vm959, %v939
      %1000 = vst.msk [vmem:[#allocation4 + $0x40] sm:$0xff] %vm959, %v941
      %1001 = vst.msk [vmem:[#allocation4 + $0x48] sm:$0xff] %vm959, %v943
      %1002 = vst.msk [vmem:[#allocation4 + $0x50] sm:$0xff] %vm959, %v945
      %1003 = vst.msk [vmem:[#allocation4 + $0x58] sm:$0xff] %vm959, %v947
      %1004 = vst.msk [vmem:[#allocation4 + $0x60] sm:$0xff] %vm959, %v949
      %1005 = vst.msk [vmem:[#allocation4 + $0x68] sm:$0xff] %vm959, %v951
      %1006 = vst.msk [vmem:[#allocation4 + $0x70] sm:$0xff] %vm959, %v953
      %1007 = vst.msk [vmem:[#allocation4 + $0x78] sm:$0xff] %vm959, %v955
    $region41: #{tpu_custom_call.1} parent=36 // pred_fallthru
      _
    %p1008 = scmp.gt.s32.totalorder 0, 0
    // Predicated region
    $region42: #{tpu_custom_call.1} parent=36 // pred_check
      %p1009 = pneg %p1008
    $region43: #{tpu_custom_call.1} parent=36 // pred_check_branch
      %1011 = sbr.rel (%p1009) target = $region45
    $region44: #{tpu_custom_call.1} parent=36 // pred_region
      %v1012 = vld [vmem:[#allocation2] sm:$0xff]
      %v1013 = vld [vmem:[#allocation2 + $0x8] sm:$0xff]
      %v1014 = vld [vmem:[#allocation2 + $0x10] sm:$0xff]
      %v1015 = vld [vmem:[#allocation2 + $0x18] sm:$0xff]
      %v1016 = vld [vmem:[#allocation2 + $0x20] sm:$0xff]
      %v1017 = vld [vmem:[#allocation2 + $0x28] sm:$0xff]
      %v1018 = vld [vmem:[#allocation2 + $0x30] sm:$0xff]
      %v1019 = vld [vmem:[#allocation2 + $0x38] sm:$0xff]
      %v1020 = vld [vmem:[#allocation2 + $0x40] sm:$0xff]
      %v1021 = vld [vmem:[#allocation2 + $0x48] sm:$0xff]
      %v1022 = vld [vmem:[#allocation2 + $0x50] sm:$0xff]
      %v1023 = vld [vmem:[#allocation2 + $0x58] sm:$0xff]
      %v1024 = vld [vmem:[#allocation2 + $0x60] sm:$0xff]
      %v1025 = vld [vmem:[#allocation2 + $0x68] sm:$0xff]
      %v1026 = vld [vmem:[#allocation2 + $0x70] sm:$0xff]
      %v1027 = vld [vmem:[#allocation2 + $0x78] sm:$0xff]
      %v1028 = vmax.f32 %v1012, %v845
      %v1029 = vmax.f32 %v1013, %v847
      %v1030 = vmax.f32 %v1014, %v849
      %v1031 = vmax.f32 %v1015, %v851
      %v1032 = vmax.f32 %v1016, %v853
      %v1033 = vmax.f32 %v1017, %v855
      %v1034 = vmax.f32 %v1018, %v857
      %v1035 = vmax.f32 %v1019, %v859
      %v1036 = vmax.f32 %v1020, %v861
      %v1037 = vmax.f32 %v1021, %v863
      %v1038 = vmax.f32 %v1022, %v865
      %v1039 = vmax.f32 %v1023, %v867
      %v1040 = vmax.f32 %v1024, %v869
      %v1041 = vmax.f32 %v1025, %v871
      %v1042 = vmax.f32 %v1026, %v873
      %v1043 = vmax.f32 %v1027, %v875
      %vm1044 = vcmask 7168
      %1045 = vst.msk [vmem:[#allocation2] sm:$0xff] %vm1044, %v1028
      %1046 = vst.msk [vmem:[#allocation2 + $0x8] sm:$0xff] %vm1044, %v1029
      %1047 = vst.msk [vmem:[#allocation2 + $0x10] sm:$0xff] %vm1044, %v1030
      %1048 = vst.msk [vmem:[#allocation2 + $0x18] sm:$0xff] %vm1044, %v1031
      %1049 = vst.msk [vmem:[#allocation2 + $0x20] sm:$0xff] %vm1044, %v1032
      %1050 = vst.msk [vmem:[#allocation2 + $0x28] sm:$0xff] %vm1044, %v1033
      %1051 = vst.msk [vmem:[#allocation2 + $0x30] sm:$0xff] %vm1044, %v1034
      %1052 = vst.msk [vmem:[#allocation2 + $0x38] sm:$0xff] %vm1044, %v1035
      %1053 = vst.msk [vmem:[#allocation2 + $0x40] sm:$0xff] %vm1044, %v1036
      %1054 = vst.msk [vmem:[#allocation2 + $0x48] sm:$0xff] %vm1044, %v1037
      %1055 = vst.msk [vmem:[#allocation2 + $0x50] sm:$0xff] %vm1044, %v1038
      %1056 = vst.msk [vmem:[#allocation2 + $0x58] sm:$0xff] %vm1044, %v1039
      %1057 = vst.msk [vmem:[#allocation2 + $0x60] sm:$0xff] %vm1044, %v1040
      %1058 = vst.msk [vmem:[#allocation2 + $0x68] sm:$0xff] %vm1044, %v1041
      %1059 = vst.msk [vmem:[#allocation2 + $0x70] sm:$0xff] %vm1044, %v1042
      %1060 = vst.msk [vmem:[#allocation2 + $0x78] sm:$0xff] %vm1044, %v1043
      %v1061 = vld [vmem:[#allocation3] sm:$0xff]
      %v1062 = vld [vmem:[#allocation3 + $0x8] sm:$0xff]
      %v1063 = vld [vmem:[#allocation3 + $0x10] sm:$0xff]
      %v1064 = vld [vmem:[#allocation3 + $0x18] sm:$0xff]
      %v1065 = vld [vmem:[#allocation3 + $0x20] sm:$0xff]
      %v1066 = vld [vmem:[#allocation3 + $0x28] sm:$0xff]
      %v1067 = vld [vmem:[#allocation3 + $0x30] sm:$0xff]
      %v1068 = vld [vmem:[#allocation3 + $0x38] sm:$0xff]
      %v1069 = vld [vmem:[#allocation3 + $0x40] sm:$0xff]
      %v1070 = vld [vmem:[#allocation3 + $0x48] sm:$0xff]
      %v1071 = vld [vmem:[#allocation3 + $0x50] sm:$0xff]
      %v1072 = vld [vmem:[#allocation3 + $0x58] sm:$0xff]
      %v1073 = vld [vmem:[#allocation3 + $0x60] sm:$0xff]
      %v1074 = vld [vmem:[#allocation3 + $0x68] sm:$0xff]
      %v1075 = vld [vmem:[#allocation3 + $0x70] sm:$0xff]
      %v1076 = vld [vmem:[#allocation3 + $0x78] sm:$0xff]
      %v1077 = vmax.f32 %v1061, %v877
      %v1078 = vmax.f32 %v1062, %v879
      %v1079 = vmax.f32 %v1063, %v881
      %v1080 = vmax.f32 %v1064, %v883
      %v1081 = vmax.f32 %v1065, %v885
      %v1082 = vmax.f32 %v1066, %v887
      %v1083 = vmax.f32 %v1067, %v889
      %v1084 = vmax.f32 %v1068, %v891
      %v1085 = vmax.f32 %v1069, %v893
      %v1086 = vmax.f32 %v1070, %v895
      %v1087 = vmax.f32 %v1071, %v897
      %v1088 = vmax.f32 %v1072, %v899
      %v1089 = vmax.f32 %v1073, %v901
      %v1090 = vmax.f32 %v1074, %v903
      %v1091 = vmax.f32 %v1075, %v905
      %v1092 = vmax.f32 %v1076, %v907
      %1093 = vst.msk [vmem:[#allocation3] sm:$0xff] %vm1044, %v1077
      %1094 = vst.msk [vmem:[#allocation3 + $0x8] sm:$0xff] %vm1044, %v1078
      %1095 = vst.msk [vmem:[#allocation3 + $0x10] sm:$0xff] %vm1044, %v1079
      %1096 = vst.msk [vmem:[#allocation3 + $0x18] sm:$0xff] %vm1044, %v1080
      %1097 = vst.msk [vmem:[#allocation3 + $0x20] sm:$0xff] %vm1044, %v1081
      %1098 = vst.msk [vmem:[#allocation3 + $0x28] sm:$0xff] %vm1044, %v1082
      %1099 = vst.msk [vmem:[#allocation3 + $0x30] sm:$0xff] %vm1044, %v1083
      %1100 = vst.msk [vmem:[#allocation3 + $0x38] sm:$0xff] %vm1044, %v1084
      %1101 = vst.msk [vmem:[#allocation3 + $0x40] sm:$0xff] %vm1044, %v1085
      %1102 = vst.msk [vmem:[#allocation3 + $0x48] sm:$0xff] %vm1044, %v1086
      %1103 = vst.msk [vmem:[#allocation3 + $0x50] sm:$0xff] %vm1044, %v1087
      %1104 = vst.msk [vmem:[#allocation3 + $0x58] sm:$0xff] %vm1044, %v1088
      %1105 = vst.msk [vmem:[#allocation3 + $0x60] sm:$0xff] %vm1044, %v1089
      %1106 = vst.msk [vmem:[#allocation3 + $0x68] sm:$0xff] %vm1044, %v1090
      %1107 = vst.msk [vmem:[#allocation3 + $0x70] sm:$0xff] %vm1044, %v1091
      %1108 = vst.msk [vmem:[#allocation3 + $0x78] sm:$0xff] %vm1044, %v1092
      %v1109 = vld [vmem:[#allocation4] sm:$0xff]
      %v1110 = vld [vmem:[#allocation4 + $0x8] sm:$0xff]
      %v1111 = vld [vmem:[#allocation4 + $0x10] sm:$0xff]
      %v1112 = vld [vmem:[#allocation4 + $0x18] sm:$0xff]
      %v1113 = vld [vmem:[#allocation4 + $0x20] sm:$0xff]
      %v1114 = vld [vmem:[#allocation4 + $0x28] sm:$0xff]
      %v1115 = vld [vmem:[#allocation4 + $0x30] sm:$0xff]
      %v1116 = vld [vmem:[#allocation4 + $0x38] sm:$0xff]
      %v1117 = vld [vmem:[#allocation4 + $0x40] sm:$0xff]
      %v1118 = vld [vmem:[#allocation4 + $0x48] sm:$0xff]
      %v1119 = vld [vmem:[#allocation4 + $0x50] sm:$0xff]
      %v1120 = vld [vmem:[#allocation4 + $0x58] sm:$0xff]
      %v1121 = vld [vmem:[#allocation4 + $0x60] sm:$0xff]
      %v1122 = vld [vmem:[#allocation4 + $0x68] sm:$0xff]
      %v1123 = vld [vmem:[#allocation4 + $0x70] sm:$0xff]
      %v1124 = vld [vmem:[#allocation4 + $0x78] sm:$0xff]
      %v1125 = vmin.f32 %v1109, %v925
      %v1126 = vmin.f32 %v1110, %v927
      %v1127 = vmin.f32 %v1111, %v929
      %v1128 = vmin.f32 %v1112, %v931
      %v1129 = vmin.f32 %v1113, %v933
      %v1130 = vmin.f32 %v1114, %v935
      %v1131 = vmin.f32 %v1115, %v937
      %v1132 = vmin.f32 %v1116, %v939
      %v1133 = vmin.f32 %v1117, %v941
      %v1134 = vmin.f32 %v1118, %v943
      %v1135 = vmin.f32 %v1119, %v945
      %v1136 = vmin.f32 %v1120, %v947
      %v1137 = vmin.f32 %v1121, %v949
      %v1138 = vmin.f32 %v1122, %v951
      %v1139 = vmin.f32 %v1123, %v953
      %v1140 = vmin.f32 %v1124, %v955
      %1141 = vst.msk [vmem:[#allocation4] sm:$0xff] %vm1044, %v1125
      %1142 = vst.msk [vmem:[#allocation4 + $0x8] sm:$0xff] %vm1044, %v1126
      %1143 = vst.msk [vmem:[#allocation4 + $0x10] sm:$0xff] %vm1044, %v1127
      %1144 = vst.msk [vmem:[#allocation4 + $0x18] sm:$0xff] %vm1044, %v1128
      %1145 = vst.msk [vmem:[#allocation4 + $0x20] sm:$0xff] %vm1044, %v1129
      %1146 = vst.msk [vmem:[#allocation4 + $0x28] sm:$0xff] %vm1044, %v1130
      %1147 = vst.msk [vmem:[#allocation4 + $0x30] sm:$0xff] %vm1044, %v1131
      %1148 = vst.msk [vmem:[#allocation4 + $0x38] sm:$0xff] %vm1044, %v1132
      %1149 = vst.msk [vmem:[#allocation4 + $0x40] sm:$0xff] %vm1044, %v1133
      %1150 = vst.msk [vmem:[#allocation4 + $0x48] sm:$0xff] %vm1044, %v1134
      %1151 = vst.msk [vmem:[#allocation4 + $0x50] sm:$0xff] %vm1044, %v1135
      %1152 = vst.msk [vmem:[#allocation4 + $0x58] sm:$0xff] %vm1044, %v1136
      %1153 = vst.msk [vmem:[#allocation4 + $0x60] sm:$0xff] %vm1044, %v1137
      %1154 = vst.msk [vmem:[#allocation4 + $0x68] sm:$0xff] %vm1044, %v1138
      %1155 = vst.msk [vmem:[#allocation4 + $0x70] sm:$0xff] %vm1044, %v1139
      %1156 = vst.msk [vmem:[#allocation4 + $0x78] sm:$0xff] %vm1044, %v1140
    $region45: #{tpu_custom_call.1} parent=36 // pred_fallthru
      _
  $region37: #{tpu_custom_call.1} parent=0 // pred_fallthru
    _
  // Predicated region
  $region46: #{tpu_custom_call.1} parent=0 // pred_check
    %p1157 = pneg %p380
  $region47: #{tpu_custom_call.1} parent=0 // pred_check_branch
    %1159 = sbr.rel (%p1157) target = $region49
  $region48: #{tpu_custom_call.1} parent=0 // pred_region
    %v1160 = vld [vmem:[%s2] sm:$0xff]
    %v1161 = vld [vmem:[%s2 + $0x8] sm:$0xff]
    %v1162 = vld [vmem:[%s2 + $0x10] sm:$0xff]
    %v1163 = vld [vmem:[%s2 + $0x18] sm:$0xff]
    %v1164 = vld [vmem:[%s2 + $0x20] sm:$0xff]
    %v1165 = vld [vmem:[%s2 + $0x28] sm:$0xff]
    %v1166 = vld [vmem:[%s2 + $0x30] sm:$0xff]
    %v1167 = vld [vmem:[%s2 + $0x38] sm:$0xff]
    %v1168 = vld [vmem:[%s2 + $0x40] sm:$0xff]
    %v1169 = vld [vmem:[%s2 + $0x48] sm:$0xff]
    %v1170 = vld [vmem:[%s2 + $0x50] sm:$0xff]
    %v1171 = vld [vmem:[%s2 + $0x58] sm:$0xff]
    %v1172 = vld [vmem:[%s2 + $0x60] sm:$0xff]
    %v1173 = vld [vmem:[%s2 + $0x68] sm:$0xff]
    %v1174 = vld [vmem:[%s2 + $0x70] sm:$0xff]
    %v1175 = vld [vmem:[%s2 + $0x78] sm:$0xff]
    %v1176 = vld [vmem:[#allocation2] sm:$0xff]
    %v1177 = vld [vmem:[#allocation2 + $0x8] sm:$0xff]
    %v1178 = vld [vmem:[#allocation2 + $0x10] sm:$0xff]
    %v1179 = vld [vmem:[#allocation2 + $0x18] sm:$0xff]
    %v1180 = vld [vmem:[#allocation2 + $0x20] sm:$0xff]
    %v1181 = vld [vmem:[#allocation2 + $0x28] sm:$0xff]
    %v1182 = vld [vmem:[#allocation2 + $0x30] sm:$0xff]
    %v1183 = vld [vmem:[#allocation2 + $0x38] sm:$0xff]
    %v1184 = vld [vmem:[#allocation2 + $0x40] sm:$0xff]
    %v1185 = vld [vmem:[#allocation2 + $0x48] sm:$0xff]
    %v1186 = vld [vmem:[#allocation2 + $0x50] sm:$0xff]
    %v1187 = vld [vmem:[#allocation2 + $0x58] sm:$0xff]
    %v1188 = vld [vmem:[#allocation2 + $0x60] sm:$0xff]
    %v1189 = vld [vmem:[#allocation2 + $0x68] sm:$0xff]
    %v1190 = vld [vmem:[#allocation2 + $0x70] sm:$0xff]
    %v1191 = vld [vmem:[#allocation2 + $0x78] sm:$0xff]
    %v1192 = vadd.f32 %v1160, %v1176
    %v1193 = vadd.f32 %v1161, %v1177
    %v1194 = vadd.f32 %v1162, %v1178
    %v1195 = vadd.f32 %v1163, %v1179
    %v1196 = vadd.f32 %v1164, %v1180
    %v1197 = vadd.f32 %v1165, %v1181
    %v1198 = vadd.f32 %v1166, %v1182
    %v1199 = vadd.f32 %v1167, %v1183
    %v1200 = vadd.f32 %v1168, %v1184
    %v1201 = vadd.f32 %v1169, %v1185
    %v1202 = vadd.f32 %v1170, %v1186
    %v1203 = vadd.f32 %v1171, %v1187
    %v1204 = vadd.f32 %v1172, %v1188
    %v1205 = vadd.f32 %v1173, %v1189
    %v1206 = vadd.f32 %v1174, %v1190
    %v1207 = vadd.f32 %v1175, %v1191
    %v1208 = vmax.f32 %v1192, 0.0
    %v1209 = vmax.f32 %v1193, 0.0
    %v1210 = vmax.f32 %v1194, 0.0
    %v1211 = vmax.f32 %v1195, 0.0
    %v1212 = vmax.f32 %v1196, 0.0
    %v1213 = vmax.f32 %v1197, 0.0
    %v1214 = vmax.f32 %v1198, 0.0
    %v1215 = vmax.f32 %v1199, 0.0
    %v1216 = vmax.f32 %v1200, 0.0
    %v1217 = vmax.f32 %v1201, 0.0
    %v1218 = vmax.f32 %v1202, 0.0
    %v1219 = vmax.f32 %v1203, 0.0
    %v1220 = vmax.f32 %v1204, 0.0
    %v1221 = vmax.f32 %v1205, 0.0
    %v1222 = vmax.f32 %v1206, 0.0
    %v1223 = vmax.f32 %v1207, 0.0
    %v1224 = vld [vmem:[#allocation3] sm:$0xff]
    %v1225 = vld [vmem:[#allocation3 + $0x8] sm:$0xff]
    %v1226 = vld [vmem:[#allocation3 + $0x10] sm:$0xff]
    %v1227 = vld [vmem:[#allocation3 + $0x18] sm:$0xff]
    %v1228 = vld [vmem:[#allocation3 + $0x20] sm:$0xff]
    %v1229 = vld [vmem:[#allocation3 + $0x28] sm:$0xff]
    %v1230 = vld [vmem:[#allocation3 + $0x30] sm:$0xff]
    %v1231 = vld [vmem:[#allocation3 + $0x38] sm:$0xff]
    %v1232 = vld [vmem:[#allocation3 + $0x40] sm:$0xff]
    %v1233 = vld [vmem:[#allocation3 + $0x48] sm:$0xff]
    %v1234 = vld [vmem:[#allocation3 + $0x50] sm:$0xff]
    %v1235 = vld [vmem:[#allocation3 + $0x58] sm:$0xff]
    %v1236 = vld [vmem:[#allocation3 + $0x60] sm:$0xff]
    %v1237 = vld [vmem:[#allocation3 + $0x68] sm:$0xff]
    %v1238 = vld [vmem:[#allocation3 + $0x70] sm:$0xff]
    %v1239 = vld [vmem:[#allocation3 + $0x78] sm:$0xff]
    %v1240 = vadd.f32 %v1160, %v1224
    %v1241 = vadd.f32 %v1161, %v1225
    %v1242 = vadd.f32 %v1162, %v1226
    %v1243 = vadd.f32 %v1163, %v1227
    %v1244 = vadd.f32 %v1164, %v1228
    %v1245 = vadd.f32 %v1165, %v1229
    %v1246 = vadd.f32 %v1166, %v1230
    %v1247 = vadd.f32 %v1167, %v1231
    %v1248 = vadd.f32 %v1168, %v1232
    %v1249 = vadd.f32 %v1169, %v1233
    %v1250 = vadd.f32 %v1170, %v1234
    %v1251 = vadd.f32 %v1171, %v1235
    %v1252 = vadd.f32 %v1172, %v1236
    %v1253 = vadd.f32 %v1173, %v1237
    %v1254 = vadd.f32 %v1174, %v1238
    %v1255 = vadd.f32 %v1175, %v1239
    %v1256 = vmax.f32 %v1240, 0.0
    %v1257 = vmax.f32 %v1241, 0.0
    %v1258 = vmax.f32 %v1242, 0.0
    %v1259 = vmax.f32 %v1243, 0.0
    %v1260 = vmax.f32 %v1244, 0.0
    %v1261 = vmax.f32 %v1245, 0.0
    %v1262 = vmax.f32 %v1246, 0.0
    %v1263 = vmax.f32 %v1247, 0.0
    %v1264 = vmax.f32 %v1248, 0.0
    %v1265 = vmax.f32 %v1249, 0.0
    %v1266 = vmax.f32 %v1250, 0.0
    %v1267 = vmax.f32 %v1251, 0.0
    %v1268 = vmax.f32 %v1252, 0.0
    %v1269 = vmax.f32 %v1253, 0.0
    %v1270 = vmax.f32 %v1254, 0.0
    %v1271 = vmax.f32 %v1255, 0.0
    %v1272 = vld [vmem:[#allocation4] sm:$0xff]
    %v1273 = vld [vmem:[#allocation4 + $0x8] sm:$0xff]
    %v1274 = vld [vmem:[#allocation4 + $0x10] sm:$0xff]
    %v1275 = vld [vmem:[#allocation4 + $0x18] sm:$0xff]
    %v1276 = vld [vmem:[#allocation4 + $0x20] sm:$0xff]
    %v1277 = vld [vmem:[#allocation4 + $0x28] sm:$0xff]
    %v1278 = vld [vmem:[#allocation4 + $0x30] sm:$0xff]
    %v1279 = vld [vmem:[#allocation4 + $0x38] sm:$0xff]
    %v1280 = vld [vmem:[#allocation4 + $0x40] sm:$0xff]
    %v1281 = vld [vmem:[#allocation4 + $0x48] sm:$0xff]
    %v1282 = vld [vmem:[#allocation4 + $0x50] sm:$0xff]
    %v1283 = vld [vmem:[#allocation4 + $0x58] sm:$0xff]
    %v1284 = vld [vmem:[#allocation4 + $0x60] sm:$0xff]
    %v1285 = vld [vmem:[#allocation4 + $0x68] sm:$0xff]
    %v1286 = vld [vmem:[#allocation4 + $0x70] sm:$0xff]
    %v1287 = vld [vmem:[#allocation4 + $0x78] sm:$0xff]
    %v1288 = vadd.f32 %v1160, %v1272
    %v1289 = vadd.f32 %v1161, %v1273
    %v1290 = vadd.f32 %v1162, %v1274
    %v1291 = vadd.f32 %v1163, %v1275
    %v1292 = vadd.f32 %v1164, %v1276
    %v1293 = vadd.f32 %v1165, %v1277
    %v1294 = vadd.f32 %v1166, %v1278
    %v1295 = vadd.f32 %v1167, %v1279
    %v1296 = vadd.f32 %v1168, %v1280
    %v1297 = vadd.f32 %v1169, %v1281
    %v1298 = vadd.f32 %v1170, %v1282
    %v1299 = vadd.f32 %v1171, %v1283
    %v1300 = vadd.f32 %v1172, %v1284
    %v1301 = vadd.f32 %v1173, %v1285
    %v1302 = vadd.f32 %v1174, %v1286
    %v1303 = vadd.f32 %v1175, %v1287
    %v1304 = vmax.f32 %v1288, 0.0
    %v1305 = vmax.f32 %v1289, 0.0
    %v1306 = vmax.f32 %v1290, 0.0
    %v1307 = vmax.f32 %v1291, 0.0
    %v1308 = vmax.f32 %v1292, 0.0
    %v1309 = vmax.f32 %v1293, 0.0
    %v1310 = vmax.f32 %v1294, 0.0
    %v1311 = vmax.f32 %v1295, 0.0
    %v1312 = vmax.f32 %v1296, 0.0
    %v1313 = vmax.f32 %v1297, 0.0
    %v1314 = vmax.f32 %v1298, 0.0
    %v1315 = vmax.f32 %v1299, 0.0
    %v1316 = vmax.f32 %v1300, 0.0
    %v1317 = vmax.f32 %v1301, 0.0
    %v1318 = vmax.f32 %v1302, 0.0
    %v1319 = vmax.f32 %v1303, 0.0
    %v1320 = vmin.f32 %v1304, %v1256
    %v1321 = vmin.f32 %v1305, %v1257
    %v1322 = vmin.f32 %v1306, %v1258
    %v1323 = vmin.f32 %v1307, %v1259
    %v1324 = vmin.f32 %v1308, %v1260
    %v1325 = vmin.f32 %v1309, %v1261
    %v1326 = vmin.f32 %v1310, %v1262
    %v1327 = vmin.f32 %v1311, %v1263
    %v1328 = vmin.f32 %v1312, %v1264
    %v1329 = vmin.f32 %v1313, %v1265
    %v1330 = vmin.f32 %v1314, %v1266
    %v1331 = vmin.f32 %v1315, %v1267
    %v1332 = vmin.f32 %v1316, %v1268
    %v1333 = vmin.f32 %v1317, %v1269
    %v1334 = vmin.f32 %v1318, %v1270
    %v1335 = vmin.f32 %v1319, %v1271
    %v1336 = vrsqrt.pop %v1208
    %v1337 = vmul.f32 %v1208, %v1336
    %vm1338 = vcmp.eq.f32.partialorder %v1208, inf
    %v1339 = vsel %vm1338, %v1208, %v1337
    %vm1340 = vcmp.eq.f32.partialorder %v1208, 0.0
    %v1341 = vand.u32 %v1208, 2147483648
    %v1342 = vsel %vm1340, %v1341, %v1339
    %v1343 = vrsqrt.pop %v1209
    %v1344 = vmul.f32 %v1209, %v1343
    %vm1345 = vcmp.eq.f32.partialorder %v1209, inf
    %v1346 = vsel %vm1345, %v1209, %v1344
    %vm1347 = vcmp.eq.f32.partialorder %v1209, 0.0
    %v1348 = vand.u32 %v1209, 2147483648
    %v1349 = vsel %vm1347, %v1348, %v1346
    %v1350 = vrsqrt.pop %v1210
    %v1351 = vmul.f32 %v1210, %v1350
    %vm1352 = vcmp.eq.f32.partialorder %v1210, inf
    %v1353 = vsel %vm1352, %v1210, %v1351
    %vm1354 = vcmp.eq.f32.partialorder %v1210, 0.0
    %v1355 = vand.u32 %v1210, 2147483648
    %v1356 = vsel %vm1354, %v1355, %v1353
    %v1357 = vrsqrt.pop %v1211
    %v1358 = vmul.f32 %v1211, %v1357
    %vm1359 = vcmp.eq.f32.partialorder %v1211, inf
    %v1360 = vsel %vm1359, %v1211, %v1358
    %vm1361 = vcmp.eq.f32.partialorder %v1211, 0.0
    %v1362 = vand.u32 %v1211, 2147483648
    %v1363 = vsel %vm1361, %v1362, %v1360
    %v1364 = vrsqrt.pop %v1212
    %v1365 = vmul.f32 %v1212, %v1364
    %vm1366 = vcmp.eq.f32.partialorder %v1212, inf
    %v1367 = vsel %vm1366, %v1212, %v1365
    %vm1368 = vcmp.eq.f32.partialorder %v1212, 0.0
    %v1369 = vand.u32 %v1212, 2147483648
    %v1370 = vsel %vm1368, %v1369, %v1367
    %v1371 = vrsqrt.pop %v1213
    %v1372 = vmul.f32 %v1213, %v1371
    %vm1373 = vcmp.eq.f32.partialorder %v1213, inf
    %v1374 = vsel %vm1373, %v1213, %v1372
    %vm1375 = vcmp.eq.f32.partialorder %v1213, 0.0
    %v1376 = vand.u32 %v1213, 2147483648
    %v1377 = vsel %vm1375, %v1376, %v1374
    %v1378 = vrsqrt.pop %v1214
    %v1379 = vmul.f32 %v1214, %v1378
    %vm1380 = vcmp.eq.f32.partialorder %v1214, inf
    %v1381 = vsel %vm1380, %v1214, %v1379
    %vm1382 = vcmp.eq.f32.partialorder %v1214, 0.0
    %v1383 = vand.u32 %v1214, 2147483648
    %v1384 = vsel %vm1382, %v1383, %v1381
    %v1385 = vrsqrt.pop %v1215
    %v1386 = vmul.f32 %v1215, %v1385
    %vm1387 = vcmp.eq.f32.partialorder %v1215, inf
    %v1388 = vsel %vm1387, %v1215, %v1386
    %vm1389 = vcmp.eq.f32.partialorder %v1215, 0.0
    %v1390 = vand.u32 %v1215, 2147483648
    %v1391 = vsel %vm1389, %v1390, %v1388
    %v1392 = vrsqrt.pop %v1216
    %v1393 = vmul.f32 %v1216, %v1392
    %vm1394 = vcmp.eq.f32.partialorder %v1216, inf
    %v1395 = vsel %vm1394, %v1216, %v1393
    %vm1396 = vcmp.eq.f32.partialorder %v1216, 0.0
    %v1397 = vand.u32 %v1216, 2147483648
    %v1398 = vsel %vm1396, %v1397, %v1395
    %v1399 = vrsqrt.pop %v1217
    %v1400 = vmul.f32 %v1217, %v1399
    %vm1401 = vcmp.eq.f32.partialorder %v1217, inf
    %v1402 = vsel %vm1401, %v1217, %v1400
    %vm1403 = vcmp.eq.f32.partialorder %v1217, 0.0
    %v1404 = vand.u32 %v1217, 2147483648
    %v1405 = vsel %vm1403, %v1404, %v1402
    %v1406 = vrsqrt.pop %v1218
    %v1407 = vmul.f32 %v1218, %v1406
    %vm1408 = vcmp.eq.f32.partialorder %v1218, inf
    %v1409 = vsel %vm1408, %v1218, %v1407
    %vm1410 = vcmp.eq.f32.partialorder %v1218, 0.0
    %v1411 = vand.u32 %v1218, 2147483648
    %v1412 = vsel %vm1410, %v1411, %v1409
    %v1413 = vrsqrt.pop %v1219
    %v1414 = vmul.f32 %v1219, %v1413
    %vm1415 = vcmp.eq.f32.partialorder %v1219, inf
    %v1416 = vsel %vm1415, %v1219, %v1414
    %vm1417 = vcmp.eq.f32.partialorder %v1219, 0.0
    %v1418 = vand.u32 %v1219, 2147483648
    %v1419 = vsel %vm1417, %v1418, %v1416
    %v1420 = vrsqrt.pop %v1220
    %v1421 = vmul.f32 %v1220, %v1420
    %vm1422 = vcmp.eq.f32.partialorder %v1220, inf
    %v1423 = vsel %vm1422, %v1220, %v1421
    %vm1424 = vcmp.eq.f32.partialorder %v1220, 0.0
    %v1425 = vand.u32 %v1220, 2147483648
    %v1426 = vsel %vm1424, %v1425, %v1423
    %v1427 = vrsqrt.pop %v1221
    %v1428 = vmul.f32 %v1221, %v1427
    %vm1429 = vcmp.eq.f32.partialorder %v1221, inf
    %v1430 = vsel %vm1429, %v1221, %v1428
    %vm1431 = vcmp.eq.f32.partialorder %v1221, 0.0
    %v1432 = vand.u32 %v1221, 2147483648
    %v1433 = vsel %vm1431, %v1432, %v1430
    %v1434 = vrsqrt.pop %v1222
    %v1435 = vmul.f32 %v1222, %v1434
    %vm1436 = vcmp.eq.f32.partialorder %v1222, inf
    %v1437 = vsel %vm1436, %v1222, %v1435
    %vm1438 = vcmp.eq.f32.partialorder %v1222, 0.0
    %v1439 = vand.u32 %v1222, 2147483648
    %v1440 = vsel %vm1438, %v1439, %v1437
    %v1441 = vrsqrt.pop %v1223
    %v1442 = vmul.f32 %v1223, %v1441
    %vm1443 = vcmp.eq.f32.partialorder %v1223, inf
    %v1444 = vsel %vm1443, %v1223, %v1442
    %vm1445 = vcmp.eq.f32.partialorder %v1223, 0.0
    %v1446 = vand.u32 %v1223, 2147483648
    %v1447 = vsel %vm1445, %v1446, %v1444
    %v1448 = vrsqrt.pop %v1320
    %v1449 = vmul.f32 %v1320, %v1448
    %vm1450 = vcmp.eq.f32.partialorder %v1320, inf
    %v1451 = vsel %vm1450, %v1320, %v1449
    %vm1452 = vcmp.eq.f32.partialorder %v1320, 0.0
    %v1453 = vand.u32 %v1320, 2147483648
    %v1454 = vsel %vm1452, %v1453, %v1451
    %v1455 = vrsqrt.pop %v1321
    %v1456 = vmul.f32 %v1321, %v1455
    %vm1457 = vcmp.eq.f32.partialorder %v1321, inf
    %v1458 = vsel %vm1457, %v1321, %v1456
    %vm1459 = vcmp.eq.f32.partialorder %v1321, 0.0
    %v1460 = vand.u32 %v1321, 2147483648
    %v1461 = vsel %vm1459, %v1460, %v1458
    %v1462 = vrsqrt.pop %v1322
    %v1463 = vmul.f32 %v1322, %v1462
    %vm1464 = vcmp.eq.f32.partialorder %v1322, inf
    %v1465 = vsel %vm1464, %v1322, %v1463
    %vm1466 = vcmp.eq.f32.partialorder %v1322, 0.0
    %v1467 = vand.u32 %v1322, 2147483648
    %v1468 = vsel %vm1466, %v1467, %v1465
    %v1469 = vrsqrt.pop %v1323
    %v1470 = vmul.f32 %v1323, %v1469
    %vm1471 = vcmp.eq.f32.partialorder %v1323, inf
    %v1472 = vsel %vm1471, %v1323, %v1470
    %vm1473 = vcmp.eq.f32.partialorder %v1323, 0.0
    %v1474 = vand.u32 %v1323, 2147483648
    %v1475 = vsel %vm1473, %v1474, %v1472
    %v1476 = vrsqrt.pop %v1324
    %v1477 = vmul.f32 %v1324, %v1476
    %vm1478 = vcmp.eq.f32.partialorder %v1324, inf
    %v1479 = vsel %vm1478, %v1324, %v1477
    %vm1480 = vcmp.eq.f32.partialorder %v1324, 0.0
    %v1481 = vand.u32 %v1324, 2147483648
    %v1482 = vsel %vm1480, %v1481, %v1479
    %v1483 = vrsqrt.pop %v1325
    %v1484 = vmul.f32 %v1325, %v1483
    %vm1485 = vcmp.eq.f32.partialorder %v1325, inf
    %v1486 = vsel %vm1485, %v1325, %v1484
    %vm1487 = vcmp.eq.f32.partialorder %v1325, 0.0
    %v1488 = vand.u32 %v1325, 2147483648
    %v1489 = vsel %vm1487, %v1488, %v1486
    %v1490 = vrsqrt.pop %v1326
    %v1491 = vmul.f32 %v1326, %v1490
    %vm1492 = vcmp.eq.f32.partialorder %v1326, inf
    %v1493 = vsel %vm1492, %v1326, %v1491
    %vm1494 = vcmp.eq.f32.partialorder %v1326, 0.0
    %v1495 = vand.u32 %v1326, 2147483648
    %v1496 = vsel %vm1494, %v1495, %v1493
    %v1497 = vrsqrt.pop %v1327
    %v1498 = vmul.f32 %v1327, %v1497
    %vm1499 = vcmp.eq.f32.partialorder %v1327, inf
    %v1500 = vsel %vm1499, %v1327, %v1498
    %vm1501 = vcmp.eq.f32.partialorder %v1327, 0.0
    %v1502 = vand.u32 %v1327, 2147483648
    %v1503 = vsel %vm1501, %v1502, %v1500
    %v1504 = vrsqrt.pop %v1328
    %v1505 = vmul.f32 %v1328, %v1504
    %vm1506 = vcmp.eq.f32.partialorder %v1328, inf
    %v1507 = vsel %vm1506, %v1328, %v1505
    %vm1508 = vcmp.eq.f32.partialorder %v1328, 0.0
    %v1509 = vand.u32 %v1328, 2147483648
    %v1510 = vsel %vm1508, %v1509, %v1507
    %v1511 = vrsqrt.pop %v1329
    %v1512 = vmul.f32 %v1329, %v1511
    %vm1513 = vcmp.eq.f32.partialorder %v1329, inf
    %v1514 = vsel %vm1513, %v1329, %v1512
    %vm1515 = vcmp.eq.f32.partialorder %v1329, 0.0
    %v1516 = vand.u32 %v1329, 2147483648
    %v1517 = vsel %vm1515, %v1516, %v1514
    %v1518 = vrsqrt.pop %v1330
    %v1519 = vmul.f32 %v1330, %v1518
    %vm1520 = vcmp.eq.f32.partialorder %v1330, inf
    %v1521 = vsel %vm1520, %v1330, %v1519
    %vm1522 = vcmp.eq.f32.partialorder %v1330, 0.0
    %v1523 = vand.u32 %v1330, 2147483648
    %v1524 = vsel %vm1522, %v1523, %v1521
    %v1525 = vrsqrt.pop %v1331
    %v1526 = vmul.f32 %v1331, %v1525
    %vm1527 = vcmp.eq.f32.partialorder %v1331, inf
    %v1528 = vsel %vm1527, %v1331, %v1526
    %vm1529 = vcmp.eq.f32.partialorder %v1331, 0.0
    %v1530 = vand.u32 %v1331, 2147483648
    %v1531 = vsel %vm1529, %v1530, %v1528
    %v1532 = vrsqrt.pop %v1332
    %v1533 = vmul.f32 %v1332, %v1532
    %vm1534 = vcmp.eq.f32.partialorder %v1332, inf
    %v1535 = vsel %vm1534, %v1332, %v1533
    %vm1536 = vcmp.eq.f32.partialorder %v1332, 0.0
    %v1537 = vand.u32 %v1332, 2147483648
    %v1538 = vsel %vm1536, %v1537, %v1535
    %v1539 = vrsqrt.pop %v1333
    %v1540 = vmul.f32 %v1333, %v1539
    %vm1541 = vcmp.eq.f32.partialorder %v1333, inf
    %v1542 = vsel %vm1541, %v1333, %v1540
    %vm1543 = vcmp.eq.f32.partialorder %v1333, 0.0
    %v1544 = vand.u32 %v1333, 2147483648
    %v1545 = vsel %vm1543, %v1544, %v1542
    %v1546 = vrsqrt.pop %v1334
    %v1547 = vmul.f32 %v1334, %v1546
    %vm1548 = vcmp.eq.f32.partialorder %v1334, inf
    %v1549 = vsel %vm1548, %v1334, %v1547
    %vm1550 = vcmp.eq.f32.partialorder %v1334, 0.0
    %v1551 = vand.u32 %v1334, 2147483648
    %v1552 = vsel %vm1550, %v1551, %v1549
    %v1553 = vrsqrt.pop %v1335
    %v1554 = vmul.f32 %v1335, %v1553
    %vm1555 = vcmp.eq.f32.partialorder %v1335, inf
    %v1556 = vsel %vm1555, %v1335, %v1554
    %vm1557 = vcmp.eq.f32.partialorder %v1335, 0.0
    %v1558 = vand.u32 %v1335, 2147483648
    %v1559 = vsel %vm1557, %v1558, %v1556
    %v1560 = vsub.f32 %v1342, %v1454
    %v1561 = vsub.f32 %v1349, %v1461
    %v1562 = vsub.f32 %v1356, %v1468
    %v1563 = vsub.f32 %v1363, %v1475
    %v1564 = vsub.f32 %v1370, %v1482
    %v1565 = vsub.f32 %v1377, %v1489
    %v1566 = vsub.f32 %v1384, %v1496
    %v1567 = vsub.f32 %v1391, %v1503
    %v1568 = vsub.f32 %v1398, %v1510
    %v1569 = vsub.f32 %v1405, %v1517
    %v1570 = vsub.f32 %v1412, %v1524
    %v1571 = vsub.f32 %v1419, %v1531
    %v1572 = vsub.f32 %v1426, %v1538
    %v1573 = vsub.f32 %v1433, %v1545
    %v1574 = vsub.f32 %v1440, %v1552
    %v1575 = vsub.f32 %v1447, %v1559
    %v1576 = vadd.f32 %v1560, 0.0
    %v1577 = vadd.f32 %v1561, 0.0
    %v1578 = vadd.f32 %v1562, 0.0
    %v1579 = vadd.f32 %v1563, 0.0
    %v1580 = vadd.f32 %v1564, 0.0
    %v1581 = vadd.f32 %v1565, 0.0
    %v1582 = vadd.f32 %v1566, 0.0
    %v1583 = vadd.f32 %v1567, 0.0
    %v1584 = vadd.f32 %v1568, 0.0
    %v1585 = vadd.f32 %v1569, 0.0
    %v1586 = vadd.f32 %v1570, 0.0
    %v1587 = vadd.f32 %v1571, 0.0
    %v1588 = vadd.f32 %v1572, 0.0
    %v1589 = vadd.f32 %v1573, 0.0
    %v1590 = vadd.f32 %v1574, 0.0
    %v1591 = vadd.f32 %v1575, 0.0
    %v1592 = vmax.f32 %v1576, 0.0
    %v1593 = vmax.f32 %v1577, 0.0
    %v1594 = vmax.f32 %v1578, 0.0
    %v1595 = vmax.f32 %v1579, 0.0
    %v1596 = vmax.f32 %v1580, 0.0
    %v1597 = vmax.f32 %v1581, 0.0
    %v1598 = vmax.f32 %v1582, 0.0
    %v1599 = vmax.f32 %v1583, 0.0
    %v1600 = vmax.f32 %v1584, 0.0
    %v1601 = vmax.f32 %v1585, 0.0
    %v1602 = vmax.f32 %v1586, 0.0
    %v1603 = vmax.f32 %v1587, 0.0
    %v1604 = vmax.f32 %v1588, 0.0
    %v1605 = vmax.f32 %v1589, 0.0
    %v1606 = vmax.f32 %v1590, 0.0
    %v1607 = vmax.f32 %v1591, 0.0
    %vm1608 = vcmask 7168
    %1609 = vst.msk [vmem:[%s6] sm:$0xff] %vm1608, %v1592
    %1610 = vst.msk [vmem:[%s6 + $0x8] sm:$0xff] %vm1608, %v1593
    %1611 = vst.msk [vmem:[%s6 + $0x10] sm:$0xff] %vm1608, %v1594
    %1612 = vst.msk [vmem:[%s6 + $0x18] sm:$0xff] %vm1608, %v1595
    %1613 = vst.msk [vmem:[%s6 + $0x20] sm:$0xff] %vm1608, %v1596
    %1614 = vst.msk [vmem:[%s6 + $0x28] sm:$0xff] %vm1608, %v1597
    %1615 = vst.msk [vmem:[%s6 + $0x30] sm:$0xff] %vm1608, %v1598
    %1616 = vst.msk [vmem:[%s6 + $0x38] sm:$0xff] %vm1608, %v1599
    %1617 = vst.msk [vmem:[%s6 + $0x40] sm:$0xff] %vm1608, %v1600
    %1618 = vst.msk [vmem:[%s6 + $0x48] sm:$0xff] %vm1608, %v1601
    %1619 = vst.msk [vmem:[%s6 + $0x50] sm:$0xff] %vm1608, %v1602
    %1620 = vst.msk [vmem:[%s6 + $0x58] sm:$0xff] %vm1608, %v1603
    %1621 = vst.msk [vmem:[%s6 + $0x60] sm:$0xff] %vm1608, %v1604
    %1622 = vst.msk [vmem:[%s6 + $0x68] sm:$0xff] %vm1608, %v1605
    %1623 = vst.msk [vmem:[%s6 + $0x70] sm:$0xff] %vm1608, %v1606
    %1624 = vst.msk [vmem:[%s6 + $0x78] sm:$0xff] %vm1608, %v1607
  $region49: #{tpu_custom_call.1} parent=0 // pred_fallthru
    _
  // Predicated region
  $region50: #{tpu_custom_call.1} parent=0 // pred_check
    _
  $region51: #{tpu_custom_call.1} parent=0 // pred_check_branch
    %1626 = sbr.rel (0) target = $region53
  $region52: #{tpu_custom_call.1} parent=0 // pred_region
    _
  $region53: #{tpu_custom_call.1} parent=0 // pred_fallthru
    _
  // Predicated region
  $region54: #{tpu_custom_call.1} parent=0 // pred_check
    _
  $region55: #{tpu_custom_call.1} parent=0 // pred_check_branch
    %1628 = sbr.rel (0) target = $region57
  $region56: #{tpu_custom_call.1} parent=0 // pred_region
    _
  $region57: #{tpu_custom_call.1} parent=0 // pred_fallthru
    _

</llo_original>
